<compile_context>
chip_gen: v7x
topology: tpu7x:2x2x1
jax: 0.10.0
libtpu: 0.0.40
codegen_flags: <defaults>
</compile_context>

<pallas_src>
import functools

import jax
import jax.numpy as jnp
from jax.experimental import pallas as pl
from jax.experimental.pallas import tpu as pltpu

WIN_SIZES = (3, 4, 5)
LANE = 128
NEG_INF = -1e30   # padded-class bias -> exp() underflows to exactly 0


def _make_kernel(TB, L, E, FPAD, CPAD, max_win):
    TBL = TB * L

    def kernel(x_ref, wconv_ref, bconv_ref, mask_ref, wfc_ref, bfc_ref,
               pooled_ref, probs_ref):
        x = x_ref[...]                                        # (TB*L, E) bf16

        # ---- Fused-K LHS ----------------------------------------------------
        # Lane block k of x_cat holds x shifted up by k rows, so the single MXU
        # matmul below contracts over taps AND embedding (K = max_win*E) instead
        # of max_win tiny K=E matmuls + f32 rolls + f32 adds on the product.
        # Rolls operate on the narrow f32 input (32 lanes) - far less XLU work
        # than rolling the (TB*L, FPAD) f32 product as before.
        x32 = x.astype(jnp.float32)
        taps = [x32]
        for k in range(1, max_win):                           # static unroll
            taps.append(pltpu.roll(x32, shift=TBL - k, axis=0))
        x_cat = jnp.concatenate(taps, axis=-1).astype(jnp.bfloat16)  # (TBL, max_win*E)

        acc = jnp.dot(x_cat, wconv_ref[...],
                      preferred_element_type=jnp.float32)     # (TBL, FPAD)
        acc = jnp.maximum(acc + bconv_ref[...], 0.0)          # Conv1d bias + ReLU

        # ---- Mask + full-length MaxPool1d per example -------------------------
        # mask_ref is a precomputed resident (L, FPAD) 0/1 slab: position p is
        # valid for window size w iff p <= L - w; pad lanes are always 0.
        # Masking to 0 AFTER ReLU cannot change the per-example max because the
        # true max is >= 0 (requires L >= max(WIN_SIZES)); it also zeroes rows
        # that wrapped across example boundaries in the rolls above.
        acc = acc.reshape(TB, L, FPAD) * mask_ref[...]
        pooled = jnp.max(acc, axis=1)                         # (TB, FPAD)
        pooled_ref[...] = pooled

        # ---- Fused Linear + softmax(dim=1) ------------------------------------
        # Dropout(p=0.5) is the identity in eval mode.  Output is lane-dense
        # (CPAD = 128); padded classes carry bias = -1e30 so exp() gives 0 and
        # they do not perturb the softmax.  Padded batch rows are finite garbage
        # and are sliced off in the wrapper.
        logits = jnp.dot(pooled.astype(jnp.bfloat16), wfc_ref[...],
                         preferred_element_type=jnp.float32) + bfc_ref[...]
        m = jnp.max(logits, axis=-1, keepdims=True)
        e = jnp.exp(logits - m)
        s = jnp.sum(e, axis=-1, keepdims=True)
        # approx reciprocal runs on the EUP slot; probs sum to 1 only to ~1e-3.
        probs_ref[...] = e * pl.reciprocal(s, approx=True)

    return kernel


def pack_text_cnn_params(params, input_len):
    """One-time re-layout of PyTorch-style params into fused, lane-padded slabs.

    Hoisted out of the per-call jitted path so the .at[].set chains and fc
    re-ordering are not replayed on every forward call.
    """
    E = params["embedding"].shape[1]
    F = params["conv_b"][0].shape[0]
    C = params["fc_b"].shape[0]
    n_win = len(WIN_SIZES)
    max_win = max(WIN_SIZES)
    assert input_len >= max_win, "mask-after-ReLU trick requires L >= max window"
    nwF = n_win * F
    FPAD = ((nwF + LANE - 1) // LANE) * LANE
    CPAD = ((C + LANE - 1) // LANE) * LANE
    L = input_len

    wconv = jnp.zeros((max_win, E, FPAD), jnp.float32)        # zero taps for win<max_win
    bconv = jnp.zeros((1, FPAD), jnp.float32)
    mask = jnp.zeros((L, FPAD), jnp.float32)                  # pad lanes never valid
    wfc = jnp.zeros((FPAD, CPAD), jnp.float32)
    bfc = jnp.full((1, CPAD), NEG_INF, jnp.float32)           # pad classes -> exp()==0

    # fc weight (C, F*n_win) acts on torch features ordered [f*n_win + wi].
    wfc_blk = jnp.transpose(params["fc_w"].reshape(C, F, n_win), (2, 1, 0))  # (n_win,F,C)
    for wi, win in enumerate(WIN_SIZES):
        lo = wi * F
        wconv = wconv.at[:win, :, lo:lo + F].set(
            jnp.transpose(params["conv_w"][wi], (2, 1, 0)))    # (win, E, F)
        bconv = bconv.at[0, lo:lo + F].set(params["conv_b"][wi])
        mask = mask.at[:L - win + 1, lo:lo + F].set(1.0)
        wfc = wfc.at[lo:lo + F, :C].set(wfc_blk[wi])
    bfc = bfc.at[0, :C].set(params["fc_b"])

    packed = {
        "wconv": wconv.reshape(max_win * E, FPAD).astype(jnp.bfloat16),  # fused-K RHS
        "bconv": bconv,
        "mask": mask,
        "wfc": wfc.astype(jnp.bfloat16),
        "bfc": bfc,
    }
    meta = {"E": E, "F": F, "C": C, "nwF": nwF, "FPAD": FPAD, "CPAD": CPAD,
            "max_win": max_win, "L": L}
    return packed, meta


def text_cnn_forward(ids, embedding, packed, *, meta, block_batch=256):
    """Forward pass (eval mode).  `packed`/`meta` from pack_text_cnn_params()."""
    B, L = ids.shape
    E = embedding.shape[1]
    assert L == meta["L"] and E == meta["E"]
    FPAD, CPAD, max_win = meta["FPAD"], meta["CPAD"], meta["max_win"]
    F, C, nwF = meta["F"], meta["C"], meta["nwF"]
    n_win = len(WIN_SIZES)

    # TODO(synk): fuse the embedding gather into the kernel (scalar-prefetch ids
    # + per-row DMA gather) instead of materializing (B, L, E) bf16 in HBM.
    x = embedding[ids].astype(jnp.bfloat16)                   # (B, L, E)

    # Examples per grid step: big enough to amortize per-step pipeline overhead,
    # but at least 2 grid steps so both v7x TensorCores get work on the
    # "parallel" batch axis (no effect on 1-TC v5e/v6e).
    TB = min(block_batch, max(8, ((B + 1) // 2 + 7) // 8 * 8))
    TB = max(8, (TB // 8) * 8)
    B_pad = pl.cdiv(B, TB) * TB
    if B_pad != B:
        x = jnp.concatenate([x, jnp.zeros((B_pad - B, L, E), x.dtype)], axis=0)
    x_flat = x.reshape(B_pad * L, E)                          # batch*pos on sublanes

    kernel = _make_kernel(TB, L, E, FPAD, CPAD, max_win)

    in_specs = [
        pl.BlockSpec((TB * L, E), lambda i: (i, 0)),          # per-step activations
        pl.BlockSpec((max_win * E, FPAD), lambda i: (0, 0)),  # resident fused conv slab
        pl.BlockSpec((1, FPAD), lambda i: (0, 0)),            # conv bias
        pl.BlockSpec((L, FPAD), lambda i: (0, 0)),            # validity mask
        pl.BlockSpec((FPAD, CPAD), lambda i: (0, 0)),         # fc weight (bf16)
        pl.BlockSpec((1, CPAD), lambda i: (0, 0)),            # fc bias (pad = -1e30)
    ]
    out_shape = (jax.ShapeDtypeStruct((B_pad, FPAD), jnp.float32),
                 jax.ShapeDtypeStruct((B_pad, CPAD), jnp.float32))
    out_specs = (pl.BlockSpec((TB, FPAD), lambda i: (i, 0)),
                 pl.BlockSpec((TB, CPAD), lambda i: (i, 0)))

    pooled, probs = pl.pallas_call(
        kernel,
        out_shape=out_shape,
        grid_spec=pltpu.PrefetchScalarGridSpec(
            num_scalar_prefetch=0,
            grid=(B_pad // TB,),
            in_specs=in_specs,
            out_specs=out_specs,
        ),
        compiler_params=pltpu.CompilerParams(dimension_semantics=("parallel",)),
    )(x_flat, packed["wconv"], packed["bconv"], packed["mask"],
      packed["wfc"], packed["bfc"])

    pooled = pooled[:B, :nwF]                                 # drop lane/batch padding
    # feature_extracted: torch.cat(x_list, 2) -> (B, F, n_win) -> view(B, -1)
    feature = jnp.transpose(pooled.reshape(B, n_win, F), (0, 2, 1)).reshape(B, nwF)
    return probs[:B, :C], feature


def ref_forward(ids, params):
    """Pure-JAX reference replicating the PyTorch forward (eval mode)."""
    emb = params["embedding"]
    x = emb[ids].astype(jnp.float32)                          # (B, L, E)
    xt = jnp.transpose(x, (0, 2, 1))                          # (B, E, L) -- NCW
    feats = []
    for wi, win in enumerate(WIN_SIZES):
        y = jax.lax.conv_general_dilated(
            xt, params["conv_w"][wi], window_strides=(1,), padding="VALID",
            dimension_numbers=("NCH", "OIH", "NCH"))          # (B, F, Lout)
        y = jnp.maximum(y + params["conv_b"][wi][None, :, None], 0.0)
        feats.append(jnp.max(y, axis=2))                      # maxpool over full length
    out = jnp.stack(feats, axis=2)                            # (B, F, n_win)
    feat = out.reshape(out.shape[0], -1)
    logits = feat @ params["fc_w"].T + params["fc_b"]
    return jax.nn.softmax(logits, axis=1), feat


if __name__ == "__main__":
    V, E, F, L, C = 50, 32, 16, 16, 3    # vocab, emb dim, filters, input_len, classes
    B = 64                               # 2 parallel batch blocks of 32 examples

    key = jax.random.PRNGKey(0)
    keys = jax.random.split(key, 10)
    params = {
        "embedding": jax.random.normal(keys[0], (V, E), jnp.float32),
        "conv_w": [0.1 * jax.random.normal(keys[1 + i], (F, E, w), jnp.float32)
                   for i, w in enumerate(WIN_SIZES)],
        "conv_b": [0.01 * jax.random.normal(keys[4 + i], (F,), jnp.float32)
                   for i in range(len(WIN_SIZES))],
        "fc_w": 0.1 * jax.random.normal(keys[7], (C, F * len(WIN_SIZES)), jnp.float32),
        "fc_b": 0.01 * jax.random.normal(keys[8], (C,), jnp.float32),
    }
    ids = jax.random.randint(keys[9], (B, L), 0, V)

    packed, meta = pack_text_cnn_params(params, input_len=L)   # one-time re-layout
    fwd = jax.jit(functools.partial(text_cnn_forward, meta=meta, block_batch=32))
    probs, feat = fwd(ids, params["embedding"], packed)
    jax.block_until_ready((probs, feat))

    probs_ref, feat_ref = ref_forward(ids, params)
    assert probs.shape == (B, C) and feat.shape == (B, F * len(WIN_SIZES))
    assert jnp.allclose(feat, feat_ref, rtol=2e-2, atol=2e-2), "feature mismatch"
    assert jnp.allclose(probs, probs_ref, rtol=2e-2, atol=2e-2), "probs mismatch"
    print("KERNEL_OK")
</pallas_src>

<mosaic_0001>
module attributes {stable_mosaic.version = 11 : i64} {
  func.func @kernel(%arg0: i32, %arg1: memref<512x32xbf16, #tpu.memory_space<vmem>>, %arg2: memref<160x128xbf16, #tpu.memory_space<vmem>>, %arg3: memref<1x128xf32, #tpu.memory_space<vmem>>, %arg4: memref<16x128xf32, #tpu.memory_space<vmem>>, %arg5: memref<128x128xbf16, #tpu.memory_space<vmem>>, %arg6: memref<1x128xf32, #tpu.memory_space<vmem>>, %arg7: memref<32x128xf32, #tpu.memory_space<vmem>>, %arg8: memref<32x128xf32, #tpu.memory_space<vmem>>) attributes {dimension_semantics = [#tpu.dimension_semantics<parallel>], iteration_bounds = array<i64: 2>, scalar_prefetch = 0 : i64, scratch_operands = 0 : i64, tpu.core_type = #tpu.core_type<tc>, window_params = [{transform_indices = @transform_0, window_bounds = array<i64: 512, 32>}, {pipeline_mode = #tpu.pipeline_mode<synchronous>, transform_indices = @transform_1, window_bounds = array<i64: 160, 128>}, {pipeline_mode = #tpu.pipeline_mode<synchronous>, transform_indices = @transform_2, window_bounds = array<i64: 1, 128>}, {pipeline_mode = #tpu.pipeline_mode<synchronous>, transform_indices = @transform_3, window_bounds = array<i64: 16, 128>}, {pipeline_mode = #tpu.pipeline_mode<synchronous>, transform_indices = @transform_4, window_bounds = array<i64: 128, 128>}, {pipeline_mode = #tpu.pipeline_mode<synchronous>, transform_indices = @transform_5, window_bounds = array<i64: 1, 128>}, {transform_indices = @transform_6, window_bounds = array<i64: 32, 128>}, {transform_indices = @transform_7, window_bounds = array<i64: 32, 128>}]} {
    %c0 = arith.constant 0 : index
    %c0_0 = arith.constant 0 : index
    %0 = vector.load %arg1[%c0, %c0_0] : memref<512x32xbf16, #tpu.memory_space<vmem>>, vector<512x32xbf16>
    %1 = arith.extf %0 : vector<512x32xbf16> to vector<512x32xf32>
    %c511_i32 = arith.constant 511 : i32
    %2 = tpu.dynamic_rotate %1 by %c511_i32 dim 0 : vector<512x32xf32>, i32 -> vector<512x32xf32>
    %c510_i32 = arith.constant 510 : i32
    %3 = tpu.dynamic_rotate %1 by %c510_i32 dim 0 : vector<512x32xf32>, i32 -> vector<512x32xf32>
    %c509_i32 = arith.constant 509 : i32
    %4 = tpu.dynamic_rotate %1 by %c509_i32 dim 0 : vector<512x32xf32>, i32 -> vector<512x32xf32>
    %c508_i32 = arith.constant 508 : i32
    %5 = tpu.dynamic_rotate %1 by %c508_i32 dim 0 : vector<512x32xf32>, i32 -> vector<512x32xf32>
    %6 = tpu.concatenate %1, %2, %3, %4, %5 in 1 : vector<512x32xf32>, vector<512x32xf32>, vector<512x32xf32>, vector<512x32xf32>, vector<512x32xf32> -> vector<512x160xf32>
    %7 = arith.truncf %6 : vector<512x160xf32> to vector<512x160xbf16>
    %c0_1 = arith.constant 0 : index
    %c0_2 = arith.constant 0 : index
    %8 = vector.load %arg2[%c0_1, %c0_2] : memref<160x128xbf16, #tpu.memory_space<vmem>>, vector<160x128xbf16>
    %cst = arith.constant dense<0.000000e+00> : vector<512x128xf32>
    %9 = tpu.matmul %7, %8, %cst {dimension_numbers = #tpu.dot_dimension_numbers<[1], [0], [0], [1], [0, 0, 1, 1], [], []>} : vector<512x160xbf16>, vector<160x128xbf16>, vector<512x128xf32> -> vector<512x128xf32>
    %c0_3 = arith.constant 0 : index
    %c0_4 = arith.constant 0 : index
    %10 = vector.load %arg3[%c0_3, %c0_4] : memref<1x128xf32, #tpu.memory_space<vmem>>, vector<1x128xf32>
    %11 = vector.broadcast %10 : vector<1x128xf32> to vector<512x128xf32>
    %12 = arith.addf %9, %11 : vector<512x128xf32>
    %cst_5 = arith.constant 0.000000e+00 : f32
    %13 = vector.broadcast %cst_5 : f32 to vector<512x128xf32>
    %14 = arith.maximumf %12, %13 : vector<512x128xf32>
    %15 = vector.shape_cast %14 : vector<512x128xf32> to vector<32x16x128xf32>
    %c0_6 = arith.constant 0 : index
    %c0_7 = arith.constant 0 : index
    %16 = vector.load %arg4[%c0_6, %c0_7] : memref<16x128xf32, #tpu.memory_space<vmem>>, vector<16x128xf32>
    %17 = vector.shape_cast %16 : vector<16x128xf32> to vector<1x16x128xf32>
    %18 = vector.broadcast %17 : vector<1x16x128xf32> to vector<32x16x128xf32>
    %19 = arith.mulf %15, %18 : vector<32x16x128xf32>
    %cst_8 = arith.constant dense<0xFF800000> : vector<32x128xf32>
    %20 = vector.multi_reduction <maximumf>, %19, %cst_8 [1] : vector<32x16x128xf32> to vector<32x128xf32>
    %c0_9 = arith.constant 0 : index
    %c0_10 = arith.constant 0 : index
    %21 = vector.load %arg7[%c0_9, %c0_10] : memref<32x128xf32, #tpu.memory_space<vmem>>, vector<32x128xf32>
    tpu.vector_store %arg7[%c0_9, %c0_10], %20 {strides = array<i32>} : memref<32x128xf32, #tpu.memory_space<vmem>>, vector<32x128xf32>,
    %22 = arith.truncf %20 : vector<32x128xf32> to vector<32x128xbf16>
    %c0_11 = arith.constant 0 : index
    %c0_12 = arith.constant 0 : index
    %23 = vector.load %arg5[%c0_11, %c0_12] : memref<128x128xbf16, #tpu.memory_space<vmem>>, vector<128x128xbf16>
    %cst_13 = arith.constant dense<0.000000e+00> : vector<32x128xf32>
    %24 = tpu.matmul %22, %23, %cst_13 {dimension_numbers = #tpu.dot_dimension_numbers<[1], [0], [0], [1], [0, 0, 1, 1], [], []>} : vector<32x128xbf16>, vector<128x128xbf16>, vector<32x128xf32> -> vector<32x128xf32>
    %c0_14 = arith.constant 0 : index
    %c0_15 = arith.constant 0 : index
    %25 = vector.load %arg6[%c0_14, %c0_15] : memref<1x128xf32, #tpu.memory_space<vmem>>, vector<1x128xf32>
    %26 = vector.broadcast %25 : vector<1x128xf32> to vector<32x128xf32>
    %27 = arith.addf %24, %26 : vector<32x128xf32>
    %cst_16 = arith.constant dense<0xFF800000> : vector<32xf32>
    %28 = vector.multi_reduction <maximumf>, %27, %cst_16 [1] : vector<32x128xf32> to vector<32xf32>
    %29 = vector.shape_cast %28 : vector<32xf32> to vector<32x1xf32>
    %30 = vector.broadcast %29 : vector<32x1xf32> to vector<32x128xf32>
    %31 = arith.subf %27, %30 : vector<32x128xf32>
    %32 = math.exp %31 : vector<32x128xf32>
    %cst_17 = arith.constant dense<0.000000e+00> : vector<32xf32>
    %33 = vector.multi_reduction <add>, %32, %cst_17 [1] : vector<32x128xf32> to vector<32xf32>
    %34 = vector.shape_cast %33 : vector<32xf32> to vector<32x1xf32>
    %35 = tpu.reciprocal %34 {approx = true} : vector<32x1xf32> -> vector<32x1xf32>
    %36 = vector.broadcast %35 : vector<32x1xf32> to vector<32x128xf32>
    %37 = arith.mulf %32, %36 : vector<32x128xf32>
    %c0_18 = arith.constant 0 : index
    %c0_19 = arith.constant 0 : index
    %38 = vector.load %arg8[%c0_18, %c0_19] : memref<32x128xf32, #tpu.memory_space<vmem>>, vector<32x128xf32>
    tpu.vector_store %arg8[%c0_18, %c0_19], %37 {strides = array<i32>} : memref<32x128xf32, #tpu.memory_space<vmem>>, vector<32x128xf32>,
    return
  }
  func.func @transform_0(%arg0: i32) -> (i32, i32) {
    %c0_i32 = arith.constant 0 : i32
    %c0_i32_0 = arith.constant 0 : i32
    return %arg0, %c0_i32 : i32, i32
  }
  func.func @transform_1(%arg0: i32) -> (i32, i32) {
    %c0_i32 = arith.constant 0 : i32
    %c0_i32_0 = arith.constant 0 : i32
    %c0_i32_1 = arith.constant 0 : i32
    return %c0_i32, %c0_i32_0 : i32, i32
  }
  func.func @transform_2(%arg0: i32) -> (i32, i32) {
    %c0_i32 = arith.constant 0 : i32
    %c0_i32_0 = arith.constant 0 : i32
    %c0_i32_1 = arith.constant 0 : i32
    return %c0_i32, %c0_i32_0 : i32, i32
  }
  func.func @transform_3(%arg0: i32) -> (i32, i32) {
    %c0_i32 = arith.constant 0 : i32
    %c0_i32_0 = arith.constant 0 : i32
    %c0_i32_1 = arith.constant 0 : i32
    return %c0_i32, %c0_i32_0 : i32, i32
  }
  func.func @transform_4(%arg0: i32) -> (i32, i32) {
    %c0_i32 = arith.constant 0 : i32
    %c0_i32_0 = arith.constant 0 : i32
    %c0_i32_1 = arith.constant 0 : i32
    return %c0_i32, %c0_i32_0 : i32, i32
  }
  func.func @transform_5(%arg0: i32) -> (i32, i32) {
    %c0_i32 = arith.constant 0 : i32
    %c0_i32_0 = arith.constant 0 : i32
    %c0_i32_1 = arith.constant 0 : i32
    return %c0_i32, %c0_i32_0 : i32, i32
  }
  func.func @transform_6(%arg0: i32) -> (i32, i32) {
    %c0_i32 = arith.constant 0 : i32
    %c0_i32_0 = arith.constant 0 : i32
    return %arg0, %c0_i32 : i32, i32
  }
  func.func @transform_7(%arg0: i32) -> (i32, i32) {
    %c0_i32 = arith.constant 0 : i32
    %c0_i32_0 = arith.constant 0 : i32
    return %arg0, %c0_i32 : i32, i32
  }
}

</mosaic_0001>

<llo_original>
// kernel: text_cnn_forward.1
$region0: #{text_cnn_forward.1}
  #allocation0 [shape = 'u32[]', space=smem, size = 0x4, offset = 0x4, fixed_abs, tag = 'smem constant byte address 0x4 - core index']
  #allocation1 [shape = 'u32[144,128]{1,0:T(1,128)}', space=vmem, size = 0x12000, scoped, tag = 'internal scratch']
  %s0 = inlined_call_operand.vmem [shape: bf16[1024,32], index: 0, kind: input, shape index: {}]
  %s1 = inlined_call_operand.vmem [shape: bf16[160,128], index: 1, kind: input, shape index: {}]
  %s2 = inlined_call_operand.vmem [shape: f32[1,128], index: 2, kind: input, shape index: {}]
  %s3 = inlined_call_operand.vmem [shape: f32[16,128], index: 3, kind: input, shape index: {}]
  %s4 = inlined_call_operand.vmem [shape: bf16[128,128], index: 4, kind: input, shape index: {}]
  %s5 = inlined_call_operand.vmem [shape: f32[1,128], index: 5, kind: input, shape index: {}]
  %s6 = inlined_call_operand.vmem [shape: f32[64,128], index: 6, kind: output, shape index: {0}]
  %s7 = inlined_call_operand.vmem [shape: f32[64,128], index: 7, kind: output, shape index: {1}]
  %8 = xla_tuple %s6, %s7
  %s9 = sld [smem:[#allocation0]]
  $region65: #{text_cnn_forward.1} parent=0
    _
  %s11 = ssub.s32 1, %s9
  %s12 = scalar_select 0, %s11, %s9
  loop: start=0, step=1, limit=4
  $region2: #{text_cnn_forward.1} parent=0 // loop_pre_header
    _
  $region3: #{text_cnn_forward.1} parent=0 // loop_header
    %s14 = sphi 0, %s18
    %p15 = scmp.ge.s32.totalorder %s14, 4
    %s24 = sphi 0, %s26
    %s27 = sphi 0, %s24
    %s28 = sphi 0, %s27
    %s44 = sphi 0, %s28
    %s48 = sphi 0, %s48
    %s50 = sphi 0, %s48
    %s51 = sphi 0, %s50
    %s65 = sphi 0, %s51
    %s69 = sphi 0, %s69
    %s71 = sphi 0, %s69
    %s72 = sphi 0, %s71
    %s86 = sphi 0, %s72
    %s90 = sphi 0, %s90
    %s92 = sphi 0, %s90
    %s93 = sphi 0, %s92
    %s107 = sphi 0, %s93
    %s111 = sphi 0, %s111
    %s113 = sphi 0, %s111
    %s114 = sphi 0, %s113
    %s128 = sphi 0, %s114
    %s132 = sphi 0, %s132
    %s134 = sphi 0, %s132
    %s135 = sphi 0, %s134
    %s149 = sphi 0, %s135
    %s155 = sphi 0, %s157
    %s158 = sphi 0, %s155
    %s159 = sphi 0, %s158
    %s175 = sphi 0, %s159
    %s181 = sphi 0, %s183
    %s184 = sphi 0, %s181
    %s185 = sphi 0, %s184
    %s201 = sphi 0, %s185
  $region4: #{text_cnn_forward.1} parent=0 // loop_header_branch
    %17 = sbr.rel (%p15) target = $region8
  $region5: #{text_cnn_forward.1} parent=0 // loop_body
    %s19 = ssub.s32 %s14, 1
    %s20 = ssub.s32 %s14, 2
    %s21 = sadd.s32 %s14, 1
    %s22 = ssub.s32 %s14, %s21
    %p23 = scmp.eq.s32.totalorder %s22, 0
    %s25 = sadd.s32 %s24, 1
    %s26 = scalar_select %p23, %s24, %s25
    %p29 = pneg %p23
    %p30 = scmp.eq.s32.totalorder %s14, 1
    %p31 = por %p29, %p30
    %p32 = scmp.ne.s32.totalorder %s24, %s27
    %p33 = scmp.eq.s32.totalorder %s14, 0
    %p34 = por %p32, %p33
    %p35 = scmp.ne.s32.totalorder %s24, %s27
    %p36 = scmp.eq.s32.totalorder %s19, 1
    %p37 = por %p35, %p36
    %p38 = scmp.ne.s32.totalorder %s27, %s28
    %p39 = scmp.eq.s32.totalorder %s19, 0
    %p40 = por %p38, %p39
    %p41 = scmp.ne.s32.totalorder %s27, %s28
    %p42 = scmp.eq.s32.totalorder %s20, 1
    %p43 = por %p41, %p42
    %p45 = scmp.ne.s32.totalorder %s28, %s44
    %p46 = scmp.eq.s32.totalorder %s20, 0
    %p47 = por %p45, %p46
    %s49 = sadd.s32 %s48, 1
    %p52 = scmp.eq.s32.totalorder %s14, 1
    %p53 = scmp.ne.s32.totalorder %s48, %s50
    %p54 = scmp.eq.s32.totalorder %s14, 0
    %p55 = por %p53, %p54
    %p56 = scmp.ne.s32.totalorder %s48, %s50
    %p57 = scmp.eq.s32.totalorder %s19, 1
    %p58 = por %p56, %p57
    %p59 = scmp.ne.s32.totalorder %s50, %s51
    %p60 = scmp.eq.s32.totalorder %s19, 0
    %p61 = por %p59, %p60
    %p62 = scmp.ne.s32.totalorder %s50, %s51
    %p63 = scmp.eq.s32.totalorder %s20, 1
    %p64 = por %p62, %p63
    %p66 = scmp.ne.s32.totalorder %s51, %s65
    %p67 = scmp.eq.s32.totalorder %s20, 0
    %p68 = por %p66, %p67
    %s70 = sadd.s32 %s69, 1
    %p73 = scmp.eq.s32.totalorder %s14, 1
    %p74 = scmp.ne.s32.totalorder %s69, %s71
    %p75 = scmp.eq.s32.totalorder %s14, 0
    %p76 = por %p74, %p75
    %p77 = scmp.ne.s32.totalorder %s69, %s71
    %p78 = scmp.eq.s32.totalorder %s19, 1
    %p79 = por %p77, %p78
    %p80 = scmp.ne.s32.totalorder %s71, %s72
    %p81 = scmp.eq.s32.totalorder %s19, 0
    %p82 = por %p80, %p81
    %p83 = scmp.ne.s32.totalorder %s71, %s72
    %p84 = scmp.eq.s32.totalorder %s20, 1
    %p85 = por %p83, %p84
    %p87 = scmp.ne.s32.totalorder %s72, %s86
    %p88 = scmp.eq.s32.totalorder %s20, 0
    %p89 = por %p87, %p88
    %s91 = sadd.s32 %s90, 1
    %p94 = scmp.eq.s32.totalorder %s14, 1
    %p95 = scmp.ne.s32.totalorder %s90, %s92
    %p96 = scmp.eq.s32.totalorder %s14, 0
    %p97 = por %p95, %p96
    %p98 = scmp.ne.s32.totalorder %s90, %s92
    %p99 = scmp.eq.s32.totalorder %s19, 1
    %p100 = por %p98, %p99
    %p101 = scmp.ne.s32.totalorder %s92, %s93
    %p102 = scmp.eq.s32.totalorder %s19, 0
    %p103 = por %p101, %p102
    %p104 = scmp.ne.s32.totalorder %s92, %s93
    %p105 = scmp.eq.s32.totalorder %s20, 1
    %p106 = por %p104, %p105
    %p108 = scmp.ne.s32.totalorder %s93, %s107
    %p109 = scmp.eq.s32.totalorder %s20, 0
    %p110 = por %p108, %p109
    %s112 = sadd.s32 %s111, 1
    %p115 = scmp.eq.s32.totalorder %s14, 1
    %p116 = scmp.ne.s32.totalorder %s111, %s113
    %p117 = scmp.eq.s32.totalorder %s14, 0
    %p118 = por %p116, %p117
    %p119 = scmp.ne.s32.totalorder %s111, %s113
    %p120 = scmp.eq.s32.totalorder %s19, 1
    %p121 = por %p119, %p120
    %p122 = scmp.ne.s32.totalorder %s113, %s114
    %p123 = scmp.eq.s32.totalorder %s19, 0
    %p124 = por %p122, %p123
    %p125 = scmp.ne.s32.totalorder %s113, %s114
    %p126 = scmp.eq.s32.totalorder %s20, 1
    %p127 = por %p125, %p126
    %p129 = scmp.ne.s32.totalorder %s114, %s128
    %p130 = scmp.eq.s32.totalorder %s20, 0
    %p131 = por %p129, %p130
    %s133 = sadd.s32 %s132, 1
    %p136 = scmp.eq.s32.totalorder %s14, 1
    %p137 = scmp.ne.s32.totalorder %s132, %s134
    %p138 = scmp.eq.s32.totalorder %s14, 0
    %p139 = por %p137, %p138
    %p140 = scmp.ne.s32.totalorder %s132, %s134
    %p141 = scmp.eq.s32.totalorder %s19, 1
    %p142 = por %p140, %p141
    %p143 = scmp.ne.s32.totalorder %s134, %s135
    %p144 = scmp.eq.s32.totalorder %s19, 0
    %p145 = por %p143, %p144
    %p146 = scmp.ne.s32.totalorder %s134, %s135
    %p147 = scmp.eq.s32.totalorder %s20, 1
    %p148 = por %p146, %p147
    %p150 = scmp.ne.s32.totalorder %s135, %s149
    %p151 = scmp.eq.s32.totalorder %s20, 0
    %p152 = por %p150, %p151
    %s153 = ssub.s32 %s14, %s21
    %p154 = scmp.eq.s32.totalorder %s153, 0
    %s156 = sadd.s32 %s155, 1
    %s157 = scalar_select %p154, %s155, %s156
    %p160 = pneg %p154
    %p161 = scmp.eq.s32.totalorder %s14, 1
    %p162 = por %p160, %p161
    %p163 = scmp.ne.s32.totalorder %s155, %s158
    %p164 = scmp.eq.s32.totalorder %s14, 0
    %p165 = por %p163, %p164
    %p166 = scmp.ne.s32.totalorder %s155, %s158
    %p167 = scmp.eq.s32.totalorder %s19, 1
    %p168 = por %p166, %p167
    %p169 = scmp.ne.s32.totalorder %s158, %s159
    %p170 = scmp.eq.s32.totalorder %s19, 0
    %p171 = por %p169, %p170
    %p172 = scmp.ne.s32.totalorder %s158, %s159
    %p173 = scmp.eq.s32.totalorder %s20, 1
    %p174 = por %p172, %p173
    %p176 = scmp.ne.s32.totalorder %s159, %s175
    %p177 = scmp.eq.s32.totalorder %s20, 0
    %p178 = por %p176, %p177
    %s179 = ssub.s32 %s14, %s21
    %p180 = scmp.eq.s32.totalorder %s179, 0
    %s182 = sadd.s32 %s181, 1
    %s183 = scalar_select %p180, %s181, %s182
    %p186 = pneg %p180
    %p187 = scmp.eq.s32.totalorder %s14, 1
    %p188 = por %p186, %p187
    %p189 = scmp.ne.s32.totalorder %s181, %s184
    %p190 = scmp.eq.s32.totalorder %s14, 0
    %p191 = por %p189, %p190
    %p192 = scmp.ne.s32.totalorder %s181, %s184
    %p193 = scmp.eq.s32.totalorder %s19, 1
    %p194 = por %p192, %p193
    %p195 = scmp.ne.s32.totalorder %s184, %s185
    %p196 = scmp.eq.s32.totalorder %s19, 0
    %p197 = por %p195, %p196
    %p198 = scmp.ne.s32.totalorder %s184, %s185
    %p199 = scmp.eq.s32.totalorder %s20, 1
    %p200 = por %p198, %p199
    %p202 = scmp.ne.s32.totalorder %s185, %s201
    %p203 = scmp.eq.s32.totalorder %s20, 0
    %p204 = por %p202, %p203
    %p205 = scmp.le.s32.totalorder 1, %s14
    %p206 = scmp.lt.s32.totalorder %s14, 3
    %p207 = pnand %p205, %p206
    %p208 = pneg %p207
    // Predicated region
    $region9: #{text_cnn_forward.1} parent=5 // pred_check
      _
    $region10: #{text_cnn_forward.1} parent=5 // pred_check_branch
      %210 = sbr.rel (%p207) target = $region12
    $region11: #{text_cnn_forward.1} parent=5 // pred_region
      %s211 = ssub.s32 %s14, 1
      // Predicated region
      $region13: #{text_cnn_forward.1} parent=11 // pred_check
        %p212 = pneg %p61
      $region14: #{text_cnn_forward.1} parent=11 // pred_check_branch
        %214 = sbr.rel (%p212) target = $region16
      $region15: #{text_cnn_forward.1} parent=11 // pred_region
        _
      $region16: #{text_cnn_forward.1} parent=11 // pred_fallthru
        _
      // Predicated region
      $region17: #{text_cnn_forward.1} parent=11 // pred_check
        %p215 = pneg %p82
      $region18: #{text_cnn_forward.1} parent=11 // pred_check_branch
        %217 = sbr.rel (%p215) target = $region20
      $region19: #{text_cnn_forward.1} parent=11 // pred_region
        _
      $region20: #{text_cnn_forward.1} parent=11 // pred_fallthru
        _
      // Predicated region
      $region21: #{text_cnn_forward.1} parent=11 // pred_check
        %p218 = pneg %p103
      $region22: #{text_cnn_forward.1} parent=11 // pred_check_branch
        %220 = sbr.rel (%p218) target = $region24
      $region23: #{text_cnn_forward.1} parent=11 // pred_region
        _
      $region24: #{text_cnn_forward.1} parent=11 // pred_fallthru
        _
      // Predicated region
      $region25: #{text_cnn_forward.1} parent=11 // pred_check
        %p221 = pneg %p124
      $region26: #{text_cnn_forward.1} parent=11 // pred_check_branch
        %223 = sbr.rel (%p221) target = $region28
      $region27: #{text_cnn_forward.1} parent=11 // pred_region
        _
      $region28: #{text_cnn_forward.1} parent=11 // pred_fallthru
        _
      // Predicated region
      $region29: #{text_cnn_forward.1} parent=11 // pred_check
        %p224 = pneg %p145
      $region30: #{text_cnn_forward.1} parent=11 // pred_check_branch
        %226 = sbr.rel (%p224) target = $region32
      $region31: #{text_cnn_forward.1} parent=11 // pred_region
        _
      $region32: #{text_cnn_forward.1} parent=11 // pred_fallthru
        _
    $region12: #{text_cnn_forward.1} parent=5 // pred_fallthru
      _
    %p227 = scmp.lt.s32.totalorder %s14, 2
    // Predicated region
    $region33: #{text_cnn_forward.1} parent=5 // pred_check
      %p228 = pneg %p227
    $region34: #{text_cnn_forward.1} parent=5 // pred_check_branch
      %230 = sbr.rel (%p228) target = $region36
    $region35: #{text_cnn_forward.1} parent=5 // pred_region
      // Predicated region
      $region37: #{text_cnn_forward.1} parent=35 // pred_check
        %p231 = pneg %p34
      $region38: #{text_cnn_forward.1} parent=35 // pred_check_branch
        %233 = sbr.rel (%p231) target = $region40
      $region39: #{text_cnn_forward.1} parent=35 // pred_region
        %s234 = smul.u32 64, %s14
        %p235 = scmp.lt.s32.totalorder %s234, 127
        %s236 = scalar_select %p235, %s234, 127
        %s237 = smul.addr %s236, 4
        %s238 = scalar_lea.vmem %s0, %s237
        %s239 = smul.u32 64, %s14
      $region40: #{text_cnn_forward.1} parent=35 // pred_fallthru
        _
    $region36: #{text_cnn_forward.1} parent=5 // pred_fallthru
      _
    %p240 = scmp.le.s32.totalorder 1, %s14
    %p241 = scmp.lt.s32.totalorder %s14, 3
    %p242 = pnand %p240, %p241
    %p243 = pneg %p242
    // Predicated region
    $region41: #{text_cnn_forward.1} parent=5 // pred_check
      _
    $region42: #{text_cnn_forward.1} parent=5 // pred_check_branch
      %245 = sbr.rel (%p242) target = $region44
    $region43: #{text_cnn_forward.1} parent=5 // pred_region
      %s246 = ssub.s32 %s14, 1
      %s247 = smul.u32 64, %s19
      %p248 = scmp.lt.s32.totalorder %s247, 127
      %s249 = scalar_select %p248, %s247, 127
      %s250 = smul.addr %s249, 4
      %s251 = scalar_lea.vmem %s0, %s250
      %p252 = pneg %p40
      %p253 = pneg %p37
      %p254 = pneg %p61
      %p255 = pneg %p58
      %p256 = pneg %p82
      %p257 = pneg %p79
      %p258 = pneg %p103
      %p259 = pneg %p100
      %p260 = pneg %p124
      %p261 = pneg %p121
      %p262 = pneg %p145
      %p263 = pneg %p142
      %p264 = pneg %p171
      %p265 = pneg %p168
      %s266 = smul.u32 4, %s19
      %p267 = scmp.lt.s32.totalorder %s266, 7
      %s268 = scalar_select %p267, %s266, 7
      %s269 = smul.addr %s268, 8
      %s270 = scalar_lea.vmem %s6, %s269
      %p271 = pneg %p197
      %p272 = pneg %p194
      %s273 = smul.u32 4, %s19
      %p274 = scmp.lt.s32.totalorder %s273, 7
      %s275 = scalar_select %p274, %s273, 7
      %s276 = smul.addr %s275, 8
      %s277 = scalar_lea.vmem %s7, %s276
      %s278 = smul.u32 64, %s19
      %p279 = scmp.lt.s32.totalorder %s278, 127
      %s280 = scalar_select %p279, %s278, 127
      %s281 = smul.addr %s280, 4
      %s282 = scalar_lea.vmem %s0, %s281
      %s283 = smul.u32 64, %s19
      %s284 = smul.u32 4, %s19
      %p285 = scmp.lt.s32.totalorder %s284, 7
      %s286 = scalar_select %p285, %s284, 7
      %s287 = smul.addr %s286, 8
      %s288 = scalar_lea.vmem %s6, %s287
      %s289 = smul.u32 4, %s19
      %s290 = smul.u32 4, %s19
      %p291 = scmp.lt.s32.totalorder %s290, 7
      %s292 = scalar_select %p291, %s290, 7
      %s293 = smul.addr %s292, 8
      %s294 = scalar_lea.vmem %s7, %s293
      %s295 = smul.u32 4, %s19
      %v297 = vld [vmem:[%s282] sm:$0xf]
      %v298 = vld [vmem:[%s282 + $0x4] sm:$0xf]
      %v299 = vld [vmem:[%s282 + $0x8] sm:$0xf]
      %v300 = vld [vmem:[%s282 + $0xc] sm:$0xf]
      %v301 = vld [vmem:[%s282 + $0x10] sm:$0xf]
      %v302 = vld [vmem:[%s282 + $0x14] sm:$0xf]
      %v303 = vld [vmem:[%s282 + $0x18] sm:$0xf]
      %v304 = vld [vmem:[%s282 + $0x1c] sm:$0xf]
      %v305 = vld [vmem:[%s282 + $0x20] sm:$0xf]
      %v306 = vld [vmem:[%s282 + $0x24] sm:$0xf]
      %v307 = vld [vmem:[%s282 + $0x28] sm:$0xf]
      %v308 = vld [vmem:[%s282 + $0x2c] sm:$0xf]
      %v309 = vld [vmem:[%s282 + $0x30] sm:$0xf]
      %v310 = vld [vmem:[%s282 + $0x34] sm:$0xf]
      %v311 = vld [vmem:[%s282 + $0x38] sm:$0xf]
      %v312 = vld [vmem:[%s282 + $0x3c] sm:$0xf]
      %v313 = vld [vmem:[%s282 + $0x40] sm:$0xf]
      %v314 = vld [vmem:[%s282 + $0x44] sm:$0xf]
      %v315 = vld [vmem:[%s282 + $0x48] sm:$0xf]
      %v316 = vld [vmem:[%s282 + $0x4c] sm:$0xf]
      %v317 = vld [vmem:[%s282 + $0x50] sm:$0xf]
      %v318 = vld [vmem:[%s282 + $0x54] sm:$0xf]
      %v319 = vld [vmem:[%s282 + $0x58] sm:$0xf]
      %v320 = vld [vmem:[%s282 + $0x5c] sm:$0xf]
      %v321 = vld [vmem:[%s282 + $0x60] sm:$0xf]
      %v322 = vld [vmem:[%s282 + $0x64] sm:$0xf]
      %v323 = vld [vmem:[%s282 + $0x68] sm:$0xf]
      %v324 = vld [vmem:[%s282 + $0x6c] sm:$0xf]
      %v325 = vld [vmem:[%s282 + $0x70] sm:$0xf]
      %v326 = vld [vmem:[%s282 + $0x74] sm:$0xf]
      %v327 = vld [vmem:[%s282 + $0x78] sm:$0xf]
      %v328 = vld [vmem:[%s282 + $0x7c] sm:$0xf]
      %v329 = vld [vmem:[%s282 + $0x80] sm:$0xf]
      %v330 = vld [vmem:[%s282 + $0x84] sm:$0xf]
      %v331 = vld [vmem:[%s282 + $0x88] sm:$0xf]
      %v332 = vld [vmem:[%s282 + $0x8c] sm:$0xf]
      %v333 = vld [vmem:[%s282 + $0x90] sm:$0xf]
      %v334 = vld [vmem:[%s282 + $0x94] sm:$0xf]
      %v335 = vld [vmem:[%s282 + $0x98] sm:$0xf]
      %v336 = vld [vmem:[%s282 + $0x9c] sm:$0xf]
      %v337 = vld [vmem:[%s282 + $0xa0] sm:$0xf]
      %v338 = vld [vmem:[%s282 + $0xa4] sm:$0xf]
      %v339 = vld [vmem:[%s282 + $0xa8] sm:$0xf]
      %v340 = vld [vmem:[%s282 + $0xac] sm:$0xf]
      %v341 = vld [vmem:[%s282 + $0xb0] sm:$0xf]
      %v342 = vld [vmem:[%s282 + $0xb4] sm:$0xf]
      %v343 = vld [vmem:[%s282 + $0xb8] sm:$0xf]
      %v344 = vld [vmem:[%s282 + $0xbc] sm:$0xf]
      %v345 = vld [vmem:[%s282 + $0xc0] sm:$0xf]
      %v346 = vld [vmem:[%s282 + $0xc4] sm:$0xf]
      %v347 = vld [vmem:[%s282 + $0xc8] sm:$0xf]
      %v348 = vld [vmem:[%s282 + $0xcc] sm:$0xf]
      %v349 = vld [vmem:[%s282 + $0xd0] sm:$0xf]
      %v350 = vld [vmem:[%s282 + $0xd4] sm:$0xf]
      %v351 = vld [vmem:[%s282 + $0xd8] sm:$0xf]
      %v352 = vld [vmem:[%s282 + $0xdc] sm:$0xf]
      %v353 = vld [vmem:[%s282 + $0xe0] sm:$0xf]
      %v354 = vld [vmem:[%s282 + $0xe4] sm:$0xf]
      %v355 = vld [vmem:[%s282 + $0xe8] sm:$0xf]
      %v356 = vld [vmem:[%s282 + $0xec] sm:$0xf]
      %v357 = vld [vmem:[%s282 + $0xf0] sm:$0xf]
      %v358 = vld [vmem:[%s282 + $0xf4] sm:$0xf]
      %v359 = vld [vmem:[%s282 + $0xf8] sm:$0xf]
      %v360 = vld [vmem:[%s282 + $0xfc] sm:$0xf]
      %v361 = vunpack.c.l.bf16 %v297
      %v362 = vunpack.c.l.bf16 %v298
      %v363 = vunpack.c.l.bf16 %v299
      %v364 = vunpack.c.l.bf16 %v300
      %v365 = vunpack.c.l.bf16 %v301
      %v366 = vunpack.c.l.bf16 %v302
      %v367 = vunpack.c.l.bf16 %v303
      %v368 = vunpack.c.l.bf16 %v304
      %v369 = vunpack.c.l.bf16 %v305
      %v370 = vunpack.c.l.bf16 %v306
      %v371 = vunpack.c.l.bf16 %v307
      %v372 = vunpack.c.l.bf16 %v308
      %v373 = vunpack.c.l.bf16 %v309
      %v374 = vunpack.c.l.bf16 %v310
      %v375 = vunpack.c.l.bf16 %v311
      %v376 = vunpack.c.l.bf16 %v312
      %v377 = vunpack.c.l.bf16 %v313
      %v378 = vunpack.c.l.bf16 %v314
      %v379 = vunpack.c.l.bf16 %v315
      %v380 = vunpack.c.l.bf16 %v316
      %v381 = vunpack.c.l.bf16 %v317
      %v382 = vunpack.c.l.bf16 %v318
      %v383 = vunpack.c.l.bf16 %v319
      %v384 = vunpack.c.l.bf16 %v320
      %v385 = vunpack.c.l.bf16 %v321
      %v386 = vunpack.c.l.bf16 %v322
      %v387 = vunpack.c.l.bf16 %v323
      %v388 = vunpack.c.l.bf16 %v324
      %v389 = vunpack.c.l.bf16 %v325
      %v390 = vunpack.c.l.bf16 %v326
      %v391 = vunpack.c.l.bf16 %v327
      %v392 = vunpack.c.l.bf16 %v328
      %v393 = vunpack.c.l.bf16 %v329
      %v394 = vunpack.c.l.bf16 %v330
      %v395 = vunpack.c.l.bf16 %v331
      %v396 = vunpack.c.l.bf16 %v332
      %v397 = vunpack.c.l.bf16 %v333
      %v398 = vunpack.c.l.bf16 %v334
      %v399 = vunpack.c.l.bf16 %v335
      %v400 = vunpack.c.l.bf16 %v336
      %v401 = vunpack.c.l.bf16 %v337
      %v402 = vunpack.c.l.bf16 %v338
      %v403 = vunpack.c.l.bf16 %v339
      %v404 = vunpack.c.l.bf16 %v340
      %v405 = vunpack.c.l.bf16 %v341
      %v406 = vunpack.c.l.bf16 %v342
      %v407 = vunpack.c.l.bf16 %v343
      %v408 = vunpack.c.l.bf16 %v344
      %v409 = vunpack.c.l.bf16 %v345
      %v410 = vunpack.c.l.bf16 %v346
      %v411 = vunpack.c.l.bf16 %v347
      %v412 = vunpack.c.l.bf16 %v348
      %v413 = vunpack.c.l.bf16 %v349
      %v414 = vunpack.c.l.bf16 %v350
      %v415 = vunpack.c.l.bf16 %v351
      %v416 = vunpack.c.l.bf16 %v352
      %v417 = vunpack.c.l.bf16 %v353
      %v418 = vunpack.c.l.bf16 %v354
      %v419 = vunpack.c.l.bf16 %v355
      %v420 = vunpack.c.l.bf16 %v356
      %v421 = vunpack.c.l.bf16 %v357
      %v422 = vunpack.c.l.bf16 %v358
      %v423 = vunpack.c.l.bf16 %v359
      %v424 = vunpack.c.l.bf16 %v360
      %v425 = vrot.slane %v361, 1
      %v426 = vrot.slane %v362, 1
      %v427 = vrot.slane %v363, 1
      %v428 = vrot.slane %v364, 1
      %v429 = vrot.slane %v365, 1
      %v430 = vrot.slane %v366, 1
      %v431 = vrot.slane %v367, 1
      %v432 = vrot.slane %v368, 1
      %v433 = vrot.slane %v369, 1
      %v434 = vrot.slane %v370, 1
      %v435 = vrot.slane %v371, 1
      %v436 = vrot.slane %v372, 1
      %v437 = vrot.slane %v373, 1
      %v438 = vrot.slane %v374, 1
      %v439 = vrot.slane %v375, 1
      %v440 = vrot.slane %v376, 1
      %v441 = vrot.slane %v377, 1
      %v442 = vrot.slane %v378, 1
      %v443 = vrot.slane %v379, 1
      %v444 = vrot.slane %v380, 1
      %v445 = vrot.slane %v381, 1
      %v446 = vrot.slane %v382, 1
      %v447 = vrot.slane %v383, 1
      %v448 = vrot.slane %v384, 1
      %v449 = vrot.slane %v385, 1
      %v450 = vrot.slane %v386, 1
      %v451 = vrot.slane %v387, 1
      %v452 = vrot.slane %v388, 1
      %v453 = vrot.slane %v389, 1
      %v454 = vrot.slane %v390, 1
      %v455 = vrot.slane %v391, 1
      %v456 = vrot.slane %v392, 1
      %v457 = vrot.slane %v393, 1
      %v458 = vrot.slane %v394, 1
      %v459 = vrot.slane %v395, 1
      %v460 = vrot.slane %v396, 1
      %v461 = vrot.slane %v397, 1
      %v462 = vrot.slane %v398, 1
      %v463 = vrot.slane %v399, 1
      %v464 = vrot.slane %v400, 1
      %v465 = vrot.slane %v401, 1
      %v466 = vrot.slane %v402, 1
      %v467 = vrot.slane %v403, 1
      %v468 = vrot.slane %v404, 1
      %v469 = vrot.slane %v405, 1
      %v470 = vrot.slane %v406, 1
      %v471 = vrot.slane %v407, 1
      %v472 = vrot.slane %v408, 1
      %v473 = vrot.slane %v409, 1
      %v474 = vrot.slane %v410, 1
      %v475 = vrot.slane %v411, 1
      %v476 = vrot.slane %v412, 1
      %v477 = vrot.slane %v413, 1
      %v478 = vrot.slane %v414, 1
      %v479 = vrot.slane %v415, 1
      %v480 = vrot.slane %v416, 1
      %v481 = vrot.slane %v417, 1
      %v482 = vrot.slane %v418, 1
      %v483 = vrot.slane %v419, 1
      %v484 = vrot.slane %v420, 1
      %v485 = vrot.slane %v421, 1
      %v486 = vrot.slane %v422, 1
      %v487 = vrot.slane %v423, 1
      %v488 = vrot.slane %v424, 1
      %v489 = vlaneseq
      %v490 = vshrl.u32 %v489, 7
      %vm491 = vcmp.lt.s32.totalorder %v490, 7
      %v492 = vsel %vm491, %v487, %v488
      %v493 = vsel %vm491, %v486, %v487
      %v494 = vsel %vm491, %v485, %v486
      %v495 = vsel %vm491, %v484, %v485
      %v496 = vsel %vm491, %v483, %v484
      %v497 = vsel %vm491, %v482, %v483
      %v498 = vsel %vm491, %v481, %v482
      %v499 = vsel %vm491, %v480, %v481
      %v500 = vsel %vm491, %v479, %v480
      %v501 = vsel %vm491, %v478, %v479
      %v502 = vsel %vm491, %v477, %v478
      %v503 = vsel %vm491, %v476, %v477
      %v504 = vsel %vm491, %v475, %v476
      %v505 = vsel %vm491, %v474, %v475
      %v506 = vsel %vm491, %v473, %v474
      %v507 = vsel %vm491, %v472, %v473
      %v508 = vsel %vm491, %v471, %v472
      %v509 = vsel %vm491, %v470, %v471
      %v510 = vsel %vm491, %v469, %v470
      %v511 = vsel %vm491, %v468, %v469
      %v512 = vsel %vm491, %v467, %v468
      %v513 = vsel %vm491, %v466, %v467
      %v514 = vsel %vm491, %v465, %v466
      %v515 = vsel %vm491, %v464, %v465
      %v516 = vsel %vm491, %v463, %v464
      %v517 = vsel %vm491, %v462, %v463
      %v518 = vsel %vm491, %v461, %v462
      %v519 = vsel %vm491, %v460, %v461
      %v520 = vsel %vm491, %v459, %v460
      %v521 = vsel %vm491, %v458, %v459
      %v522 = vsel %vm491, %v457, %v458
      %v523 = vsel %vm491, %v456, %v457
      %v524 = vsel %vm491, %v455, %v456
      %v525 = vsel %vm491, %v454, %v455
      %v526 = vsel %vm491, %v453, %v454
      %v527 = vsel %vm491, %v452, %v453
      %v528 = vsel %vm491, %v451, %v452
      %v529 = vsel %vm491, %v450, %v451
      %v530 = vsel %vm491, %v449, %v450
      %v531 = vsel %vm491, %v448, %v449
      %v532 = vsel %vm491, %v447, %v448
      %v533 = vsel %vm491, %v446, %v447
      %v534 = vsel %vm491, %v445, %v446
      %v535 = vsel %vm491, %v444, %v445
      %v536 = vsel %vm491, %v443, %v444
      %v537 = vsel %vm491, %v442, %v443
      %v538 = vsel %vm491, %v441, %v442
      %v539 = vsel %vm491, %v440, %v441
      %v540 = vsel %vm491, %v439, %v440
      %v541 = vsel %vm491, %v438, %v439
      %v542 = vsel %vm491, %v437, %v438
      %v543 = vsel %vm491, %v436, %v437
      %v544 = vsel %vm491, %v435, %v436
      %v545 = vsel %vm491, %v434, %v435
      %v546 = vsel %vm491, %v433, %v434
      %v547 = vsel %vm491, %v432, %v433
      %v548 = vsel %vm491, %v431, %v432
      %v549 = vsel %vm491, %v430, %v431
      %v550 = vsel %vm491, %v429, %v430
      %v551 = vsel %vm491, %v428, %v429
      %v552 = vsel %vm491, %v427, %v428
      %v553 = vsel %vm491, %v426, %v427
      %v554 = vsel %vm491, %v425, %v426
      %v555 = vsel %vm491, %v488, %v425
      %v556 = vrot.slane %v361, 2
      %v557 = vrot.slane %v362, 2
      %v558 = vrot.slane %v363, 2
      %v559 = vrot.slane %v364, 2
      %v560 = vrot.slane %v365, 2
      %v561 = vrot.slane %v366, 2
      %v562 = vrot.slane %v367, 2
      %v563 = vrot.slane %v368, 2
      %v564 = vrot.slane %v369, 2
      %v565 = vrot.slane %v370, 2
      %v566 = vrot.slane %v371, 2
      %v567 = vrot.slane %v372, 2
      %v568 = vrot.slane %v373, 2
      %v569 = vrot.slane %v374, 2
      %v570 = vrot.slane %v375, 2
      %v571 = vrot.slane %v376, 2
      %v572 = vrot.slane %v377, 2
      %v573 = vrot.slane %v378, 2
      %v574 = vrot.slane %v379, 2
      %v575 = vrot.slane %v380, 2
      %v576 = vrot.slane %v381, 2
      %v577 = vrot.slane %v382, 2
      %v578 = vrot.slane %v383, 2
      %v579 = vrot.slane %v384, 2
      %v580 = vrot.slane %v385, 2
      %v581 = vrot.slane %v386, 2
      %v582 = vrot.slane %v387, 2
      %v583 = vrot.slane %v388, 2
      %v584 = vrot.slane %v389, 2
      %v585 = vrot.slane %v390, 2
      %v586 = vrot.slane %v391, 2
      %v587 = vrot.slane %v392, 2
      %v588 = vrot.slane %v393, 2
      %v589 = vrot.slane %v394, 2
      %v590 = vrot.slane %v395, 2
      %v591 = vrot.slane %v396, 2
      %v592 = vrot.slane %v397, 2
      %v593 = vrot.slane %v398, 2
      %v594 = vrot.slane %v399, 2
      %v595 = vrot.slane %v400, 2
      %v596 = vrot.slane %v401, 2
      %v597 = vrot.slane %v402, 2
      %v598 = vrot.slane %v403, 2
      %v599 = vrot.slane %v404, 2
      %v600 = vrot.slane %v405, 2
      %v601 = vrot.slane %v406, 2
      %v602 = vrot.slane %v407, 2
      %v603 = vrot.slane %v408, 2
      %v604 = vrot.slane %v409, 2
      %v605 = vrot.slane %v410, 2
      %v606 = vrot.slane %v411, 2
      %v607 = vrot.slane %v412, 2
      %v608 = vrot.slane %v413, 2
      %v609 = vrot.slane %v414, 2
      %v610 = vrot.slane %v415, 2
      %v611 = vrot.slane %v416, 2
      %v612 = vrot.slane %v417, 2
      %v613 = vrot.slane %v418, 2
      %v614 = vrot.slane %v419, 2
      %v615 = vrot.slane %v420, 2
      %v616 = vrot.slane %v421, 2
      %v617 = vrot.slane %v422, 2
      %v618 = vrot.slane %v423, 2
      %v619 = vrot.slane %v424, 2
      %vm620 = vcmp.lt.s32.totalorder %v490, 6
      %v621 = vsel %vm620, %v618, %v619
      %v622 = vsel %vm620, %v617, %v618
      %v623 = vsel %vm620, %v616, %v617
      %v624 = vsel %vm620, %v615, %v616
      %v625 = vsel %vm620, %v614, %v615
      %v626 = vsel %vm620, %v613, %v614
      %v627 = vsel %vm620, %v612, %v613
      %v628 = vsel %vm620, %v611, %v612
      %v629 = vsel %vm620, %v610, %v611
      %v630 = vsel %vm620, %v609, %v610
      %v631 = vsel %vm620, %v608, %v609
      %v632 = vsel %vm620, %v607, %v608
      %v633 = vsel %vm620, %v606, %v607
      %v634 = vsel %vm620, %v605, %v606
      %v635 = vsel %vm620, %v604, %v605
      %v636 = vsel %vm620, %v603, %v604
      %v637 = vsel %vm620, %v602, %v603
      %v638 = vsel %vm620, %v601, %v602
      %v639 = vsel %vm620, %v600, %v601
      %v640 = vsel %vm620, %v599, %v600
      %v641 = vsel %vm620, %v598, %v599
      %v642 = vsel %vm620, %v597, %v598
      %v643 = vsel %vm620, %v596, %v597
      %v644 = vsel %vm620, %v595, %v596
      %v645 = vsel %vm620, %v594, %v595
      %v646 = vsel %vm620, %v593, %v594
      %v647 = vsel %vm620, %v592, %v593
      %v648 = vsel %vm620, %v591, %v592
      %v649 = vsel %vm620, %v590, %v591
      %v650 = vsel %vm620, %v589, %v590
      %v651 = vsel %vm620, %v588, %v589
      %v652 = vsel %vm620, %v587, %v588
      %v653 = vsel %vm620, %v586, %v587
      %v654 = vsel %vm620, %v585, %v586
      %v655 = vsel %vm620, %v584, %v585
      %v656 = vsel %vm620, %v583, %v584
      %v657 = vsel %vm620, %v582, %v583
      %v658 = vsel %vm620, %v581, %v582
      %v659 = vsel %vm620, %v580, %v581
      %v660 = vsel %vm620, %v579, %v580
      %v661 = vsel %vm620, %v578, %v579
      %v662 = vsel %vm620, %v577, %v578
      %v663 = vsel %vm620, %v576, %v577
      %v664 = vsel %vm620, %v575, %v576
      %v665 = vsel %vm620, %v574, %v575
      %v666 = vsel %vm620, %v573, %v574
      %v667 = vsel %vm620, %v572, %v573
      %v668 = vsel %vm620, %v571, %v572
      %v669 = vsel %vm620, %v570, %v571
      %v670 = vsel %vm620, %v569, %v570
      %v671 = vsel %vm620, %v568, %v569
      %v672 = vsel %vm620, %v567, %v568
      %v673 = vsel %vm620, %v566, %v567
      %v674 = vsel %vm620, %v565, %v566
      %v675 = vsel %vm620, %v564, %v565
      %v676 = vsel %vm620, %v563, %v564
      %v677 = vsel %vm620, %v562, %v563
      %v678 = vsel %vm620, %v561, %v562
      %v679 = vsel %vm620, %v560, %v561
      %v680 = vsel %vm620, %v559, %v560
      %v681 = vsel %vm620, %v558, %v559
      %v682 = vsel %vm620, %v557, %v558
      %v683 = vsel %vm620, %v556, %v557
      %v684 = vsel %vm620, %v619, %v556
      %v685 = vrot.slane %v361, 3
      %v686 = vrot.slane %v362, 3
      %v687 = vrot.slane %v363, 3
      %v688 = vrot.slane %v364, 3
      %v689 = vrot.slane %v365, 3
      %v690 = vrot.slane %v366, 3
      %v691 = vrot.slane %v367, 3
      %v692 = vrot.slane %v368, 3
      %v693 = vrot.slane %v369, 3
      %v694 = vrot.slane %v370, 3
      %v695 = vrot.slane %v371, 3
      %v696 = vrot.slane %v372, 3
      %v697 = vrot.slane %v373, 3
      %v698 = vrot.slane %v374, 3
      %v699 = vrot.slane %v375, 3
      %v700 = vrot.slane %v376, 3
      %v701 = vrot.slane %v377, 3
      %v702 = vrot.slane %v378, 3
      %v703 = vrot.slane %v379, 3
      %v704 = vrot.slane %v380, 3
      %v705 = vrot.slane %v381, 3
      %v706 = vrot.slane %v382, 3
      %v707 = vrot.slane %v383, 3
      %v708 = vrot.slane %v384, 3
      %v709 = vrot.slane %v385, 3
      %v710 = vrot.slane %v386, 3
      %v711 = vrot.slane %v387, 3
      %v712 = vrot.slane %v388, 3
      %v713 = vrot.slane %v389, 3
      %v714 = vrot.slane %v390, 3
      %v715 = vrot.slane %v391, 3
      %v716 = vrot.slane %v392, 3
      %v717 = vrot.slane %v393, 3
      %v718 = vrot.slane %v394, 3
      %v719 = vrot.slane %v395, 3
      %v720 = vrot.slane %v396, 3
      %v721 = vrot.slane %v397, 3
      %v722 = vrot.slane %v398, 3
      %v723 = vrot.slane %v399, 3
      %v724 = vrot.slane %v400, 3
      %v725 = vrot.slane %v401, 3
      %v726 = vrot.slane %v402, 3
      %v727 = vrot.slane %v403, 3
      %v728 = vrot.slane %v404, 3
      %v729 = vrot.slane %v405, 3
      %v730 = vrot.slane %v406, 3
      %v731 = vrot.slane %v407, 3
      %v732 = vrot.slane %v408, 3
      %v733 = vrot.slane %v409, 3
      %v734 = vrot.slane %v410, 3
      %v735 = vrot.slane %v411, 3
      %v736 = vrot.slane %v412, 3
      %v737 = vrot.slane %v413, 3
      %v738 = vrot.slane %v414, 3
      %v739 = vrot.slane %v415, 3
      %v740 = vrot.slane %v416, 3
      %v741 = vrot.slane %v417, 3
      %v742 = vrot.slane %v418, 3
      %v743 = vrot.slane %v419, 3
      %v744 = vrot.slane %v420, 3
      %v745 = vrot.slane %v421, 3
      %v746 = vrot.slane %v422, 3
      %v747 = vrot.slane %v423, 3
      %v748 = vrot.slane %v424, 3
      %vm749 = vcmp.lt.s32.totalorder %v490, 5
      %v750 = vsel %vm749, %v747, %v748
      %v751 = vsel %vm749, %v746, %v747
      %v752 = vsel %vm749, %v745, %v746
      %v753 = vsel %vm749, %v744, %v745
      %v754 = vsel %vm749, %v743, %v744
      %v755 = vsel %vm749, %v742, %v743
      %v756 = vsel %vm749, %v741, %v742
      %v757 = vsel %vm749, %v740, %v741
      %v758 = vsel %vm749, %v739, %v740
      %v759 = vsel %vm749, %v738, %v739
      %v760 = vsel %vm749, %v737, %v738
      %v761 = vsel %vm749, %v736, %v737
      %v762 = vsel %vm749, %v735, %v736
      %v763 = vsel %vm749, %v734, %v735
      %v764 = vsel %vm749, %v733, %v734
      %v765 = vsel %vm749, %v732, %v733
      %v766 = vsel %vm749, %v731, %v732
      %v767 = vsel %vm749, %v730, %v731
      %v768 = vsel %vm749, %v729, %v730
      %v769 = vsel %vm749, %v728, %v729
      %v770 = vsel %vm749, %v727, %v728
      %v771 = vsel %vm749, %v726, %v727
      %v772 = vsel %vm749, %v725, %v726
      %v773 = vsel %vm749, %v724, %v725
      %v774 = vsel %vm749, %v723, %v724
      %v775 = vsel %vm749, %v722, %v723
      %v776 = vsel %vm749, %v721, %v722
      %v777 = vsel %vm749, %v720, %v721
      %v778 = vsel %vm749, %v719, %v720
      %v779 = vsel %vm749, %v718, %v719
      %v780 = vsel %vm749, %v717, %v718
      %v781 = vsel %vm749, %v716, %v717
      %v782 = vsel %vm749, %v715, %v716
      %v783 = vsel %vm749, %v714, %v715
      %v784 = vsel %vm749, %v713, %v714
      %v785 = vsel %vm749, %v712, %v713
      %v786 = vsel %vm749, %v711, %v712
      %v787 = vsel %vm749, %v710, %v711
      %v788 = vsel %vm749, %v709, %v710
      %v789 = vsel %vm749, %v708, %v709
      %v790 = vsel %vm749, %v707, %v708
      %v791 = vsel %vm749, %v706, %v707
      %v792 = vsel %vm749, %v705, %v706
      %v793 = vsel %vm749, %v704, %v705
      %v794 = vsel %vm749, %v703, %v704
      %v795 = vsel %vm749, %v702, %v703
      %v796 = vsel %vm749, %v701, %v702
      %v797 = vsel %vm749, %v700, %v701
      %v798 = vsel %vm749, %v699, %v700
      %v799 = vsel %vm749, %v698, %v699
      %v800 = vsel %vm749, %v697, %v698
      %v801 = vsel %vm749, %v696, %v697
      %v802 = vsel %vm749, %v695, %v696
      %v803 = vsel %vm749, %v694, %v695
      %v804 = vsel %vm749, %v693, %v694
      %v805 = vsel %vm749, %v692, %v693
      %v806 = vsel %vm749, %v691, %v692
      %v807 = vsel %vm749, %v690, %v691
      %v808 = vsel %vm749, %v689, %v690
      %v809 = vsel %vm749, %v688, %v689
      %v810 = vsel %vm749, %v687, %v688
      %v811 = vsel %vm749, %v686, %v687
      %v812 = vsel %vm749, %v685, %v686
      %v813 = vsel %vm749, %v748, %v685
      %v814 = vrot.slane %v361, 4
      %v815 = vrot.slane %v362, 4
      %v816 = vrot.slane %v363, 4
      %v817 = vrot.slane %v364, 4
      %v818 = vrot.slane %v365, 4
      %v819 = vrot.slane %v366, 4
      %v820 = vrot.slane %v367, 4
      %v821 = vrot.slane %v368, 4
      %v822 = vrot.slane %v369, 4
      %v823 = vrot.slane %v370, 4
      %v824 = vrot.slane %v371, 4
      %v825 = vrot.slane %v372, 4
      %v826 = vrot.slane %v373, 4
      %v827 = vrot.slane %v374, 4
      %v828 = vrot.slane %v375, 4
      %v829 = vrot.slane %v376, 4
      %v830 = vrot.slane %v377, 4
      %v831 = vrot.slane %v378, 4
      %v832 = vrot.slane %v379, 4
      %v833 = vrot.slane %v380, 4
      %v834 = vrot.slane %v381, 4
      %v835 = vrot.slane %v382, 4
      %v836 = vrot.slane %v383, 4
      %v837 = vrot.slane %v384, 4
      %v838 = vrot.slane %v385, 4
      %v839 = vrot.slane %v386, 4
      %v840 = vrot.slane %v387, 4
      %v841 = vrot.slane %v388, 4
      %v842 = vrot.slane %v389, 4
      %v843 = vrot.slane %v390, 4
      %v844 = vrot.slane %v391, 4
      %v845 = vrot.slane %v392, 4
      %v846 = vrot.slane %v393, 4
      %v847 = vrot.slane %v394, 4
      %v848 = vrot.slane %v395, 4
      %v849 = vrot.slane %v396, 4
      %v850 = vrot.slane %v397, 4
      %v851 = vrot.slane %v398, 4
      %v852 = vrot.slane %v399, 4
      %v853 = vrot.slane %v400, 4
      %v854 = vrot.slane %v401, 4
      %v855 = vrot.slane %v402, 4
      %v856 = vrot.slane %v403, 4
      %v857 = vrot.slane %v404, 4
      %v858 = vrot.slane %v405, 4
      %v859 = vrot.slane %v406, 4
      %v860 = vrot.slane %v407, 4
      %v861 = vrot.slane %v408, 4
      %v862 = vrot.slane %v409, 4
      %v863 = vrot.slane %v410, 4
      %v864 = vrot.slane %v411, 4
      %v865 = vrot.slane %v412, 4
      %v866 = vrot.slane %v413, 4
      %v867 = vrot.slane %v414, 4
      %v868 = vrot.slane %v415, 4
      %v869 = vrot.slane %v416, 4
      %v870 = vrot.slane %v417, 4
      %v871 = vrot.slane %v418, 4
      %v872 = vrot.slane %v419, 4
      %v873 = vrot.slane %v420, 4
      %v874 = vrot.slane %v421, 4
      %v875 = vrot.slane %v422, 4
      %v876 = vrot.slane %v423, 4
      %v877 = vrot.slane %v424, 4
      %vm878 = vcmp.lt.s32.totalorder %v490, 4
      %v879 = vsel %vm878, %v876, %v877
      %v880 = vsel %vm878, %v875, %v876
      %v881 = vsel %vm878, %v874, %v875
      %v882 = vsel %vm878, %v873, %v874
      %v883 = vsel %vm878, %v872, %v873
      %v884 = vsel %vm878, %v871, %v872
      %v885 = vsel %vm878, %v870, %v871
      %v886 = vsel %vm878, %v869, %v870
      %v887 = vsel %vm878, %v868, %v869
      %v888 = vsel %vm878, %v867, %v868
      %v889 = vsel %vm878, %v866, %v867
      %v890 = vsel %vm878, %v865, %v866
      %v891 = vsel %vm878, %v864, %v865
      %v892 = vsel %vm878, %v863, %v864
      %v893 = vsel %vm878, %v862, %v863
      %v894 = vsel %vm878, %v861, %v862
      %v895 = vsel %vm878, %v860, %v861
      %v896 = vsel %vm878, %v859, %v860
      %v897 = vsel %vm878, %v858, %v859
      %v898 = vsel %vm878, %v857, %v858
      %v899 = vsel %vm878, %v856, %v857
      %v900 = vsel %vm878, %v855, %v856
      %v901 = vsel %vm878, %v854, %v855
      %v902 = vsel %vm878, %v853, %v854
      %v903 = vsel %vm878, %v852, %v853
      %v904 = vsel %vm878, %v851, %v852
      %v905 = vsel %vm878, %v850, %v851
      %v906 = vsel %vm878, %v849, %v850
      %v907 = vsel %vm878, %v848, %v849
      %v908 = vsel %vm878, %v847, %v848
      %v909 = vsel %vm878, %v846, %v847
      %v910 = vsel %vm878, %v845, %v846
      %v911 = vsel %vm878, %v844, %v845
      %v912 = vsel %vm878, %v843, %v844
      %v913 = vsel %vm878, %v842, %v843
      %v914 = vsel %vm878, %v841, %v842
      %v915 = vsel %vm878, %v840, %v841
      %v916 = vsel %vm878, %v839, %v840
      %v917 = vsel %vm878, %v838, %v839
      %v918 = vsel %vm878, %v837, %v838
      %v919 = vsel %vm878, %v836, %v837
      %v920 = vsel %vm878, %v835, %v836
      %v921 = vsel %vm878, %v834, %v835
      %v922 = vsel %vm878, %v833, %v834
      %v923 = vsel %vm878, %v832, %v833
      %v924 = vsel %vm878, %v831, %v832
      %v925 = vsel %vm878, %v830, %v831
      %v926 = vsel %vm878, %v829, %v830
      %v927 = vsel %vm878, %v828, %v829
      %v928 = vsel %vm878, %v827, %v828
      %v929 = vsel %vm878, %v826, %v827
      %v930 = vsel %vm878, %v825, %v826
      %v931 = vsel %vm878, %v824, %v825
      %v932 = vsel %vm878, %v823, %v824
      %v933 = vsel %vm878, %v822, %v823
      %v934 = vsel %vm878, %v821, %v822
      %v935 = vsel %vm878, %v820, %v821
      %v936 = vsel %vm878, %v819, %v820
      %v937 = vsel %vm878, %v818, %v819
      %v938 = vsel %vm878, %v817, %v818
      %v939 = vsel %vm878, %v816, %v817
      %v940 = vsel %vm878, %v815, %v816
      %v941 = vsel %vm878, %v814, %v815
      %v942 = vsel %vm878, %v877, %v814
      %1007 = vrot.lane.b32.xlu0 %v554, 32
      %v1008 = vpop.permute.xlu0 %1007
      %1009 = vrot.lane.b32.xlu0 %v553, 32
      %v1010 = vpop.permute.xlu0 %1009
      %1011 = vrot.lane.b32.xlu0 %v552, 32
      %v1012 = vpop.permute.xlu0 %1011
      %1013 = vrot.lane.b32.xlu0 %v551, 32
      %v1014 = vpop.permute.xlu0 %1013
      %1015 = vrot.lane.b32.xlu0 %v550, 32
      %v1016 = vpop.permute.xlu0 %1015
      %1017 = vrot.lane.b32.xlu0 %v549, 32
      %v1018 = vpop.permute.xlu0 %1017
      %1019 = vrot.lane.b32.xlu0 %v548, 32
      %v1020 = vpop.permute.xlu0 %1019
      %1021 = vrot.lane.b32.xlu0 %v547, 32
      %v1022 = vpop.permute.xlu0 %1021
      %1023 = vrot.lane.b32.xlu0 %v546, 32
      %v1024 = vpop.permute.xlu0 %1023
      %1025 = vrot.lane.b32.xlu0 %v545, 32
      %v1026 = vpop.permute.xlu0 %1025
      %1027 = vrot.lane.b32.xlu0 %v544, 32
      %v1028 = vpop.permute.xlu0 %1027
      %1029 = vrot.lane.b32.xlu0 %v543, 32
      %v1030 = vpop.permute.xlu0 %1029
      %1031 = vrot.lane.b32.xlu0 %v542, 32
      %v1032 = vpop.permute.xlu0 %1031
      %1033 = vrot.lane.b32.xlu0 %v541, 32
      %v1034 = vpop.permute.xlu0 %1033
      %1035 = vrot.lane.b32.xlu0 %v540, 32
      %v1036 = vpop.permute.xlu0 %1035
      %1037 = vrot.lane.b32.xlu0 %v539, 32
      %v1038 = vpop.permute.xlu0 %1037
      %1039 = vrot.lane.b32.xlu0 %v538, 32
      %v1040 = vpop.permute.xlu0 %1039
      %1041 = vrot.lane.b32.xlu0 %v537, 32
      %v1042 = vpop.permute.xlu0 %1041
      %1043 = vrot.lane.b32.xlu0 %v536, 32
      %v1044 = vpop.permute.xlu0 %1043
      %1045 = vrot.lane.b32.xlu0 %v535, 32
      %v1046 = vpop.permute.xlu0 %1045
      %1047 = vrot.lane.b32.xlu0 %v534, 32
      %v1048 = vpop.permute.xlu0 %1047
      %1049 = vrot.lane.b32.xlu0 %v533, 32
      %v1050 = vpop.permute.xlu0 %1049
      %1051 = vrot.lane.b32.xlu0 %v532, 32
      %v1052 = vpop.permute.xlu0 %1051
      %1053 = vrot.lane.b32.xlu0 %v531, 32
      %v1054 = vpop.permute.xlu0 %1053
      %1055 = vrot.lane.b32.xlu0 %v530, 32
      %v1056 = vpop.permute.xlu0 %1055
      %1057 = vrot.lane.b32.xlu0 %v529, 32
      %v1058 = vpop.permute.xlu0 %1057
      %1059 = vrot.lane.b32.xlu0 %v528, 32
      %v1060 = vpop.permute.xlu0 %1059
      %1061 = vrot.lane.b32.xlu0 %v527, 32
      %v1062 = vpop.permute.xlu0 %1061
      %1063 = vrot.lane.b32.xlu0 %v526, 32
      %v1064 = vpop.permute.xlu0 %1063
      %1065 = vrot.lane.b32.xlu0 %v525, 32
      %v1066 = vpop.permute.xlu0 %1065
      %1067 = vrot.lane.b32.xlu0 %v524, 32
      %v1068 = vpop.permute.xlu0 %1067
      %1069 = vrot.lane.b32.xlu0 %v523, 32
      %v1070 = vpop.permute.xlu0 %1069
      %1071 = vrot.lane.b32.xlu0 %v522, 32
      %v1072 = vpop.permute.xlu0 %1071
      %1073 = vrot.lane.b32.xlu0 %v521, 32
      %v1074 = vpop.permute.xlu0 %1073
      %1075 = vrot.lane.b32.xlu0 %v520, 32
      %v1076 = vpop.permute.xlu0 %1075
      %1077 = vrot.lane.b32.xlu0 %v519, 32
      %v1078 = vpop.permute.xlu0 %1077
      %1079 = vrot.lane.b32.xlu0 %v518, 32
      %v1080 = vpop.permute.xlu0 %1079
      %1081 = vrot.lane.b32.xlu0 %v517, 32
      %v1082 = vpop.permute.xlu0 %1081
      %1083 = vrot.lane.b32.xlu0 %v516, 32
      %v1084 = vpop.permute.xlu0 %1083
      %1085 = vrot.lane.b32.xlu0 %v515, 32
      %v1086 = vpop.permute.xlu0 %1085
      %1087 = vrot.lane.b32.xlu0 %v514, 32
      %v1088 = vpop.permute.xlu0 %1087
      %1089 = vrot.lane.b32.xlu0 %v513, 32
      %v1090 = vpop.permute.xlu0 %1089
      %1091 = vrot.lane.b32.xlu0 %v512, 32
      %v1092 = vpop.permute.xlu0 %1091
      %1093 = vrot.lane.b32.xlu0 %v511, 32
      %v1094 = vpop.permute.xlu0 %1093
      %1095 = vrot.lane.b32.xlu0 %v510, 32
      %v1096 = vpop.permute.xlu0 %1095
      %1097 = vrot.lane.b32.xlu0 %v509, 32
      %v1098 = vpop.permute.xlu0 %1097
      %1099 = vrot.lane.b32.xlu0 %v508, 32
      %v1100 = vpop.permute.xlu0 %1099
      %1101 = vrot.lane.b32.xlu0 %v507, 32
      %v1102 = vpop.permute.xlu0 %1101
      %1103 = vrot.lane.b32.xlu0 %v506, 32
      %v1104 = vpop.permute.xlu0 %1103
      %1105 = vrot.lane.b32.xlu0 %v505, 32
      %v1106 = vpop.permute.xlu0 %1105
      %1107 = vrot.lane.b32.xlu0 %v504, 32
      %v1108 = vpop.permute.xlu0 %1107
      %1109 = vrot.lane.b32.xlu0 %v503, 32
      %v1110 = vpop.permute.xlu0 %1109
      %1111 = vrot.lane.b32.xlu0 %v502, 32
      %v1112 = vpop.permute.xlu0 %1111
      %1113 = vrot.lane.b32.xlu0 %v501, 32
      %v1114 = vpop.permute.xlu0 %1113
      %1115 = vrot.lane.b32.xlu0 %v500, 32
      %v1116 = vpop.permute.xlu0 %1115
      %1117 = vrot.lane.b32.xlu0 %v499, 32
      %v1118 = vpop.permute.xlu0 %1117
      %1119 = vrot.lane.b32.xlu0 %v498, 32
      %v1120 = vpop.permute.xlu0 %1119
      %1121 = vrot.lane.b32.xlu0 %v497, 32
      %v1122 = vpop.permute.xlu0 %1121
      %1123 = vrot.lane.b32.xlu0 %v496, 32
      %v1124 = vpop.permute.xlu0 %1123
      %1125 = vrot.lane.b32.xlu0 %v495, 32
      %v1126 = vpop.permute.xlu0 %1125
      %1127 = vrot.lane.b32.xlu0 %v494, 32
      %v1128 = vpop.permute.xlu0 %1127
      %1129 = vrot.lane.b32.xlu0 %v493, 32
      %v1130 = vpop.permute.xlu0 %1129
      %1131 = vrot.lane.b32.xlu0 %v492, 32
      %v1132 = vpop.permute.xlu0 %1131
      %1133 = vrot.lane.b32.xlu0 %v555, 32
      %v1134 = vpop.permute.xlu0 %1133
      %1263 = vrot.lane.b32.xlu0 %v683, 64
      %v1264 = vpop.permute.xlu0 %1263
      %1265 = vrot.lane.b32.xlu0 %v682, 64
      %v1266 = vpop.permute.xlu0 %1265
      %1267 = vrot.lane.b32.xlu0 %v681, 64
      %v1268 = vpop.permute.xlu0 %1267
      %1269 = vrot.lane.b32.xlu0 %v680, 64
      %v1270 = vpop.permute.xlu0 %1269
      %1271 = vrot.lane.b32.xlu0 %v679, 64
      %v1272 = vpop.permute.xlu0 %1271
      %1273 = vrot.lane.b32.xlu0 %v678, 64
      %v1274 = vpop.permute.xlu0 %1273
      %1275 = vrot.lane.b32.xlu0 %v677, 64
      %v1276 = vpop.permute.xlu0 %1275
      %1277 = vrot.lane.b32.xlu0 %v676, 64
      %v1278 = vpop.permute.xlu0 %1277
      %1279 = vrot.lane.b32.xlu0 %v675, 64
      %v1280 = vpop.permute.xlu0 %1279
      %1281 = vrot.lane.b32.xlu0 %v674, 64
      %v1282 = vpop.permute.xlu0 %1281
      %1283 = vrot.lane.b32.xlu0 %v673, 64
      %v1284 = vpop.permute.xlu0 %1283
      %1285 = vrot.lane.b32.xlu0 %v672, 64
      %v1286 = vpop.permute.xlu0 %1285
      %1287 = vrot.lane.b32.xlu0 %v671, 64
      %v1288 = vpop.permute.xlu0 %1287
      %1289 = vrot.lane.b32.xlu0 %v670, 64
      %v1290 = vpop.permute.xlu0 %1289
      %1291 = vrot.lane.b32.xlu0 %v669, 64
      %v1292 = vpop.permute.xlu0 %1291
      %1293 = vrot.lane.b32.xlu0 %v668, 64
      %v1294 = vpop.permute.xlu0 %1293
      %1295 = vrot.lane.b32.xlu0 %v667, 64
      %v1296 = vpop.permute.xlu0 %1295
      %1297 = vrot.lane.b32.xlu0 %v666, 64
      %v1298 = vpop.permute.xlu0 %1297
      %1299 = vrot.lane.b32.xlu0 %v665, 64
      %v1300 = vpop.permute.xlu0 %1299
      %1301 = vrot.lane.b32.xlu0 %v664, 64
      %v1302 = vpop.permute.xlu0 %1301
      %1303 = vrot.lane.b32.xlu0 %v663, 64
      %v1304 = vpop.permute.xlu0 %1303
      %1305 = vrot.lane.b32.xlu0 %v662, 64
      %v1306 = vpop.permute.xlu0 %1305
      %1307 = vrot.lane.b32.xlu0 %v661, 64
      %v1308 = vpop.permute.xlu0 %1307
      %1309 = vrot.lane.b32.xlu0 %v660, 64
      %v1310 = vpop.permute.xlu0 %1309
      %1311 = vrot.lane.b32.xlu0 %v659, 64
      %v1312 = vpop.permute.xlu0 %1311
      %1313 = vrot.lane.b32.xlu0 %v658, 64
      %v1314 = vpop.permute.xlu0 %1313
      %1315 = vrot.lane.b32.xlu0 %v657, 64
      %v1316 = vpop.permute.xlu0 %1315
      %1317 = vrot.lane.b32.xlu0 %v656, 64
      %v1318 = vpop.permute.xlu0 %1317
      %1319 = vrot.lane.b32.xlu0 %v655, 64
      %v1320 = vpop.permute.xlu0 %1319
      %1321 = vrot.lane.b32.xlu0 %v654, 64
      %v1322 = vpop.permute.xlu0 %1321
      %1323 = vrot.lane.b32.xlu0 %v653, 64
      %v1324 = vpop.permute.xlu0 %1323
      %1325 = vrot.lane.b32.xlu0 %v652, 64
      %v1326 = vpop.permute.xlu0 %1325
      %1327 = vrot.lane.b32.xlu0 %v651, 64
      %v1328 = vpop.permute.xlu0 %1327
      %1329 = vrot.lane.b32.xlu0 %v650, 64
      %v1330 = vpop.permute.xlu0 %1329
      %1331 = vrot.lane.b32.xlu0 %v649, 64
      %v1332 = vpop.permute.xlu0 %1331
      %1333 = vrot.lane.b32.xlu0 %v648, 64
      %v1334 = vpop.permute.xlu0 %1333
      %1335 = vrot.lane.b32.xlu0 %v647, 64
      %v1336 = vpop.permute.xlu0 %1335
      %1337 = vrot.lane.b32.xlu0 %v646, 64
      %v1338 = vpop.permute.xlu0 %1337
      %1339 = vrot.lane.b32.xlu0 %v645, 64
      %v1340 = vpop.permute.xlu0 %1339
      %1341 = vrot.lane.b32.xlu0 %v644, 64
      %v1342 = vpop.permute.xlu0 %1341
      %1343 = vrot.lane.b32.xlu0 %v643, 64
      %v1344 = vpop.permute.xlu0 %1343
      %1345 = vrot.lane.b32.xlu0 %v642, 64
      %v1346 = vpop.permute.xlu0 %1345
      %1347 = vrot.lane.b32.xlu0 %v641, 64
      %v1348 = vpop.permute.xlu0 %1347
      %1349 = vrot.lane.b32.xlu0 %v640, 64
      %v1350 = vpop.permute.xlu0 %1349
      %1351 = vrot.lane.b32.xlu0 %v639, 64
      %v1352 = vpop.permute.xlu0 %1351
      %1353 = vrot.lane.b32.xlu0 %v638, 64
      %v1354 = vpop.permute.xlu0 %1353
      %1355 = vrot.lane.b32.xlu0 %v637, 64
      %v1356 = vpop.permute.xlu0 %1355
      %1357 = vrot.lane.b32.xlu0 %v636, 64
      %v1358 = vpop.permute.xlu0 %1357
      %1359 = vrot.lane.b32.xlu0 %v635, 64
      %v1360 = vpop.permute.xlu0 %1359
      %1361 = vrot.lane.b32.xlu0 %v634, 64
      %v1362 = vpop.permute.xlu0 %1361
      %1363 = vrot.lane.b32.xlu0 %v633, 64
      %v1364 = vpop.permute.xlu0 %1363
      %1365 = vrot.lane.b32.xlu0 %v632, 64
      %v1366 = vpop.permute.xlu0 %1365
      %1367 = vrot.lane.b32.xlu0 %v631, 64
      %v1368 = vpop.permute.xlu0 %1367
      %1369 = vrot.lane.b32.xlu0 %v630, 64
      %v1370 = vpop.permute.xlu0 %1369
      %1371 = vrot.lane.b32.xlu0 %v629, 64
      %v1372 = vpop.permute.xlu0 %1371
      %1373 = vrot.lane.b32.xlu0 %v628, 64
      %v1374 = vpop.permute.xlu0 %1373
      %1375 = vrot.lane.b32.xlu0 %v627, 64
      %v1376 = vpop.permute.xlu0 %1375
      %1377 = vrot.lane.b32.xlu0 %v626, 64
      %v1378 = vpop.permute.xlu0 %1377
      %1379 = vrot.lane.b32.xlu0 %v625, 64
      %v1380 = vpop.permute.xlu0 %1379
      %1381 = vrot.lane.b32.xlu0 %v624, 64
      %v1382 = vpop.permute.xlu0 %1381
      %1383 = vrot.lane.b32.xlu0 %v623, 64
      %v1384 = vpop.permute.xlu0 %1383
      %1385 = vrot.lane.b32.xlu0 %v622, 64
      %v1386 = vpop.permute.xlu0 %1385
      %1387 = vrot.lane.b32.xlu0 %v621, 64
      %v1388 = vpop.permute.xlu0 %1387
      %1389 = vrot.lane.b32.xlu0 %v684, 64
      %v1390 = vpop.permute.xlu0 %1389
      %1519 = vrot.lane.b32.xlu0 %v812, 96
      %v1520 = vpop.permute.xlu0 %1519
      %1521 = vrot.lane.b32.xlu0 %v811, 96
      %v1522 = vpop.permute.xlu0 %1521
      %1523 = vrot.lane.b32.xlu0 %v810, 96
      %v1524 = vpop.permute.xlu0 %1523
      %1525 = vrot.lane.b32.xlu0 %v809, 96
      %v1526 = vpop.permute.xlu0 %1525
      %1527 = vrot.lane.b32.xlu0 %v808, 96
      %v1528 = vpop.permute.xlu0 %1527
      %1529 = vrot.lane.b32.xlu0 %v807, 96
      %v1530 = vpop.permute.xlu0 %1529
      %1531 = vrot.lane.b32.xlu0 %v806, 96
      %v1532 = vpop.permute.xlu0 %1531
      %1533 = vrot.lane.b32.xlu0 %v805, 96
      %v1534 = vpop.permute.xlu0 %1533
      %1535 = vrot.lane.b32.xlu0 %v804, 96
      %v1536 = vpop.permute.xlu0 %1535
      %1537 = vrot.lane.b32.xlu0 %v803, 96
      %v1538 = vpop.permute.xlu0 %1537
      %1539 = vrot.lane.b32.xlu0 %v802, 96
      %v1540 = vpop.permute.xlu0 %1539
      %1541 = vrot.lane.b32.xlu0 %v801, 96
      %v1542 = vpop.permute.xlu0 %1541
      %1543 = vrot.lane.b32.xlu0 %v800, 96
      %v1544 = vpop.permute.xlu0 %1543
      %1545 = vrot.lane.b32.xlu0 %v799, 96
      %v1546 = vpop.permute.xlu0 %1545
      %1547 = vrot.lane.b32.xlu0 %v798, 96
      %v1548 = vpop.permute.xlu0 %1547
      %1549 = vrot.lane.b32.xlu0 %v797, 96
      %v1550 = vpop.permute.xlu0 %1549
      %1551 = vrot.lane.b32.xlu0 %v796, 96
      %v1552 = vpop.permute.xlu0 %1551
      %1553 = vrot.lane.b32.xlu0 %v795, 96
      %v1554 = vpop.permute.xlu0 %1553
      %1555 = vrot.lane.b32.xlu0 %v794, 96
      %v1556 = vpop.permute.xlu0 %1555
      %1557 = vrot.lane.b32.xlu0 %v793, 96
      %v1558 = vpop.permute.xlu0 %1557
      %1559 = vrot.lane.b32.xlu0 %v792, 96
      %v1560 = vpop.permute.xlu0 %1559
      %1561 = vrot.lane.b32.xlu0 %v791, 96
      %v1562 = vpop.permute.xlu0 %1561
      %1563 = vrot.lane.b32.xlu0 %v790, 96
      %v1564 = vpop.permute.xlu0 %1563
      %1565 = vrot.lane.b32.xlu0 %v789, 96
      %v1566 = vpop.permute.xlu0 %1565
      %1567 = vrot.lane.b32.xlu0 %v788, 96
      %v1568 = vpop.permute.xlu0 %1567
      %1569 = vrot.lane.b32.xlu0 %v787, 96
      %v1570 = vpop.permute.xlu0 %1569
      %1571 = vrot.lane.b32.xlu0 %v786, 96
      %v1572 = vpop.permute.xlu0 %1571
      %1573 = vrot.lane.b32.xlu0 %v785, 96
      %v1574 = vpop.permute.xlu0 %1573
      %1575 = vrot.lane.b32.xlu0 %v784, 96
      %v1576 = vpop.permute.xlu0 %1575
      %1577 = vrot.lane.b32.xlu0 %v783, 96
      %v1578 = vpop.permute.xlu0 %1577
      %1579 = vrot.lane.b32.xlu0 %v782, 96
      %v1580 = vpop.permute.xlu0 %1579
      %1581 = vrot.lane.b32.xlu0 %v781, 96
      %v1582 = vpop.permute.xlu0 %1581
      %1583 = vrot.lane.b32.xlu0 %v780, 96
      %v1584 = vpop.permute.xlu0 %1583
      %1585 = vrot.lane.b32.xlu0 %v779, 96
      %v1586 = vpop.permute.xlu0 %1585
      %1587 = vrot.lane.b32.xlu0 %v778, 96
      %v1588 = vpop.permute.xlu0 %1587
      %1589 = vrot.lane.b32.xlu0 %v777, 96
      %v1590 = vpop.permute.xlu0 %1589
      %1591 = vrot.lane.b32.xlu0 %v776, 96
      %v1592 = vpop.permute.xlu0 %1591
      %1593 = vrot.lane.b32.xlu0 %v775, 96
      %v1594 = vpop.permute.xlu0 %1593
      %1595 = vrot.lane.b32.xlu0 %v774, 96
      %v1596 = vpop.permute.xlu0 %1595
      %1597 = vrot.lane.b32.xlu0 %v773, 96
      %v1598 = vpop.permute.xlu0 %1597
      %1599 = vrot.lane.b32.xlu0 %v772, 96
      %v1600 = vpop.permute.xlu0 %1599
      %1601 = vrot.lane.b32.xlu0 %v771, 96
      %v1602 = vpop.permute.xlu0 %1601
      %1603 = vrot.lane.b32.xlu0 %v770, 96
      %v1604 = vpop.permute.xlu0 %1603
      %1605 = vrot.lane.b32.xlu0 %v769, 96
      %v1606 = vpop.permute.xlu0 %1605
      %1607 = vrot.lane.b32.xlu0 %v768, 96
      %v1608 = vpop.permute.xlu0 %1607
      %1609 = vrot.lane.b32.xlu0 %v767, 96
      %v1610 = vpop.permute.xlu0 %1609
      %1611 = vrot.lane.b32.xlu0 %v766, 96
      %v1612 = vpop.permute.xlu0 %1611
      %1613 = vrot.lane.b32.xlu0 %v765, 96
      %v1614 = vpop.permute.xlu0 %1613
      %1615 = vrot.lane.b32.xlu0 %v764, 96
      %v1616 = vpop.permute.xlu0 %1615
      %1617 = vrot.lane.b32.xlu0 %v763, 96
      %v1618 = vpop.permute.xlu0 %1617
      %1619 = vrot.lane.b32.xlu0 %v762, 96
      %v1620 = vpop.permute.xlu0 %1619
      %1621 = vrot.lane.b32.xlu0 %v761, 96
      %v1622 = vpop.permute.xlu0 %1621
      %1623 = vrot.lane.b32.xlu0 %v760, 96
      %v1624 = vpop.permute.xlu0 %1623
      %1625 = vrot.lane.b32.xlu0 %v759, 96
      %v1626 = vpop.permute.xlu0 %1625
      %1627 = vrot.lane.b32.xlu0 %v758, 96
      %v1628 = vpop.permute.xlu0 %1627
      %1629 = vrot.lane.b32.xlu0 %v757, 96
      %v1630 = vpop.permute.xlu0 %1629
      %1631 = vrot.lane.b32.xlu0 %v756, 96
      %v1632 = vpop.permute.xlu0 %1631
      %1633 = vrot.lane.b32.xlu0 %v755, 96
      %v1634 = vpop.permute.xlu0 %1633
      %1635 = vrot.lane.b32.xlu0 %v754, 96
      %v1636 = vpop.permute.xlu0 %1635
      %1637 = vrot.lane.b32.xlu0 %v753, 96
      %v1638 = vpop.permute.xlu0 %1637
      %1639 = vrot.lane.b32.xlu0 %v752, 96
      %v1640 = vpop.permute.xlu0 %1639
      %1641 = vrot.lane.b32.xlu0 %v751, 96
      %v1642 = vpop.permute.xlu0 %1641
      %1643 = vrot.lane.b32.xlu0 %v750, 96
      %v1644 = vpop.permute.xlu0 %1643
      %1645 = vrot.lane.b32.xlu0 %v813, 96
      %v1646 = vpop.permute.xlu0 %1645
      %vm1711 = vcmask 261120
      %v1712 = vsel %vm1711, %v361, %v1008
      %v1713 = vsel %vm1711, %v362, %v1010
      %v1714 = vsel %vm1711, %v363, %v1012
      %v1715 = vsel %vm1711, %v364, %v1014
      %v1716 = vsel %vm1711, %v365, %v1016
      %v1717 = vsel %vm1711, %v366, %v1018
      %v1718 = vsel %vm1711, %v367, %v1020
      %v1719 = vsel %vm1711, %v368, %v1022
      %v1720 = vsel %vm1711, %v369, %v1024
      %v1721 = vsel %vm1711, %v370, %v1026
      %v1722 = vsel %vm1711, %v371, %v1028
      %v1723 = vsel %vm1711, %v372, %v1030
      %v1724 = vsel %vm1711, %v373, %v1032
      %v1725 = vsel %vm1711, %v374, %v1034
      %v1726 = vsel %vm1711, %v375, %v1036
      %v1727 = vsel %vm1711, %v376, %v1038
      %v1728 = vsel %vm1711, %v377, %v1040
      %v1729 = vsel %vm1711, %v378, %v1042
      %v1730 = vsel %vm1711, %v379, %v1044
      %v1731 = vsel %vm1711, %v380, %v1046
      %v1732 = vsel %vm1711, %v381, %v1048
      %v1733 = vsel %vm1711, %v382, %v1050
      %v1734 = vsel %vm1711, %v383, %v1052
      %v1735 = vsel %vm1711, %v384, %v1054
      %v1736 = vsel %vm1711, %v385, %v1056
      %v1737 = vsel %vm1711, %v386, %v1058
      %v1738 = vsel %vm1711, %v387, %v1060
      %v1739 = vsel %vm1711, %v388, %v1062
      %v1740 = vsel %vm1711, %v389, %v1064
      %v1741 = vsel %vm1711, %v390, %v1066
      %v1742 = vsel %vm1711, %v391, %v1068
      %v1743 = vsel %vm1711, %v392, %v1070
      %v1744 = vsel %vm1711, %v393, %v1072
      %v1745 = vsel %vm1711, %v394, %v1074
      %v1746 = vsel %vm1711, %v395, %v1076
      %v1747 = vsel %vm1711, %v396, %v1078
      %v1748 = vsel %vm1711, %v397, %v1080
      %v1749 = vsel %vm1711, %v398, %v1082
      %v1750 = vsel %vm1711, %v399, %v1084
      %v1751 = vsel %vm1711, %v400, %v1086
      %v1752 = vsel %vm1711, %v401, %v1088
      %v1753 = vsel %vm1711, %v402, %v1090
      %v1754 = vsel %vm1711, %v403, %v1092
      %v1755 = vsel %vm1711, %v404, %v1094
      %v1756 = vsel %vm1711, %v405, %v1096
      %v1757 = vsel %vm1711, %v406, %v1098
      %v1758 = vsel %vm1711, %v407, %v1100
      %v1759 = vsel %vm1711, %v408, %v1102
      %v1760 = vsel %vm1711, %v409, %v1104
      %v1761 = vsel %vm1711, %v410, %v1106
      %v1762 = vsel %vm1711, %v411, %v1108
      %v1763 = vsel %vm1711, %v412, %v1110
      %v1764 = vsel %vm1711, %v413, %v1112
      %v1765 = vsel %vm1711, %v414, %v1114
      %v1766 = vsel %vm1711, %v415, %v1116
      %v1767 = vsel %vm1711, %v416, %v1118
      %v1768 = vsel %vm1711, %v417, %v1120
      %v1769 = vsel %vm1711, %v418, %v1122
      %v1770 = vsel %vm1711, %v419, %v1124
      %v1771 = vsel %vm1711, %v420, %v1126
      %v1772 = vsel %vm1711, %v421, %v1128
      %v1773 = vsel %vm1711, %v422, %v1130
      %v1774 = vsel %vm1711, %v423, %v1132
      %v1775 = vsel %vm1711, %v424, %v1134
      %vm1776 = vcmask 523264
      %v1777 = vsel %vm1776, %v1712, %v1264
      %v1778 = vsel %vm1776, %v1713, %v1266
      %v1779 = vsel %vm1776, %v1714, %v1268
      %v1780 = vsel %vm1776, %v1715, %v1270
      %v1781 = vsel %vm1776, %v1716, %v1272
      %v1782 = vsel %vm1776, %v1717, %v1274
      %v1783 = vsel %vm1776, %v1718, %v1276
      %v1784 = vsel %vm1776, %v1719, %v1278
      %v1785 = vsel %vm1776, %v1720, %v1280
      %v1786 = vsel %vm1776, %v1721, %v1282
      %v1787 = vsel %vm1776, %v1722, %v1284
      %v1788 = vsel %vm1776, %v1723, %v1286
      %v1789 = vsel %vm1776, %v1724, %v1288
      %v1790 = vsel %vm1776, %v1725, %v1290
      %v1791 = vsel %vm1776, %v1726, %v1292
      %v1792 = vsel %vm1776, %v1727, %v1294
      %v1793 = vsel %vm1776, %v1728, %v1296
      %v1794 = vsel %vm1776, %v1729, %v1298
      %v1795 = vsel %vm1776, %v1730, %v1300
      %v1796 = vsel %vm1776, %v1731, %v1302
      %v1797 = vsel %vm1776, %v1732, %v1304
      %v1798 = vsel %vm1776, %v1733, %v1306
      %v1799 = vsel %vm1776, %v1734, %v1308
      %v1800 = vsel %vm1776, %v1735, %v1310
      %v1801 = vsel %vm1776, %v1736, %v1312
      %v1802 = vsel %vm1776, %v1737, %v1314
      %v1803 = vsel %vm1776, %v1738, %v1316
      %v1804 = vsel %vm1776, %v1739, %v1318
      %v1805 = vsel %vm1776, %v1740, %v1320
      %v1806 = vsel %vm1776, %v1741, %v1322
      %v1807 = vsel %vm1776, %v1742, %v1324
      %v1808 = vsel %vm1776, %v1743, %v1326
      %v1809 = vsel %vm1776, %v1744, %v1328
      %v1810 = vsel %vm1776, %v1745, %v1330
      %v1811 = vsel %vm1776, %v1746, %v1332
      %v1812 = vsel %vm1776, %v1747, %v1334
      %v1813 = vsel %vm1776, %v1748, %v1336
      %v1814 = vsel %vm1776, %v1749, %v1338
      %v1815 = vsel %vm1776, %v1750, %v1340
      %v1816 = vsel %vm1776, %v1751, %v1342
      %v1817 = vsel %vm1776, %v1752, %v1344
      %v1818 = vsel %vm1776, %v1753, %v1346
      %v1819 = vsel %vm1776, %v1754, %v1348
      %v1820 = vsel %vm1776, %v1755, %v1350
      %v1821 = vsel %vm1776, %v1756, %v1352
      %v1822 = vsel %vm1776, %v1757, %v1354
      %v1823 = vsel %vm1776, %v1758, %v1356
      %v1824 = vsel %vm1776, %v1759, %v1358
      %v1825 = vsel %vm1776, %v1760, %v1360
      %v1826 = vsel %vm1776, %v1761, %v1362
      %v1827 = vsel %vm1776, %v1762, %v1364
      %v1828 = vsel %vm1776, %v1763, %v1366
      %v1829 = vsel %vm1776, %v1764, %v1368
      %v1830 = vsel %vm1776, %v1765, %v1370
      %v1831 = vsel %vm1776, %v1766, %v1372
      %v1832 = vsel %vm1776, %v1767, %v1374
      %v1833 = vsel %vm1776, %v1768, %v1376
      %v1834 = vsel %vm1776, %v1769, %v1378
      %v1835 = vsel %vm1776, %v1770, %v1380
      %v1836 = vsel %vm1776, %v1771, %v1382
      %v1837 = vsel %vm1776, %v1772, %v1384
      %v1838 = vsel %vm1776, %v1773, %v1386
      %v1839 = vsel %vm1776, %v1774, %v1388
      %v1840 = vsel %vm1776, %v1775, %v1390
      %vm1841 = vcmask 785408
      %v1842 = vsel %vm1841, %v1777, %v1520
      %v1843 = vsel %vm1841, %v1778, %v1522
      %v1844 = vsel %vm1841, %v1779, %v1524
      %v1845 = vsel %vm1841, %v1780, %v1526
      %v1846 = vsel %vm1841, %v1781, %v1528
      %v1847 = vsel %vm1841, %v1782, %v1530
      %v1848 = vsel %vm1841, %v1783, %v1532
      %v1849 = vsel %vm1841, %v1784, %v1534
      %v1850 = vsel %vm1841, %v1785, %v1536
      %v1851 = vsel %vm1841, %v1786, %v1538
      %v1852 = vsel %vm1841, %v1787, %v1540
      %v1853 = vsel %vm1841, %v1788, %v1542
      %v1854 = vsel %vm1841, %v1789, %v1544
      %v1855 = vsel %vm1841, %v1790, %v1546
      %v1856 = vsel %vm1841, %v1791, %v1548
      %v1857 = vsel %vm1841, %v1792, %v1550
      %v1858 = vsel %vm1841, %v1793, %v1552
      %v1859 = vsel %vm1841, %v1794, %v1554
      %v1860 = vsel %vm1841, %v1795, %v1556
      %v1861 = vsel %vm1841, %v1796, %v1558
      %v1862 = vsel %vm1841, %v1797, %v1560
      %v1863 = vsel %vm1841, %v1798, %v1562
      %v1864 = vsel %vm1841, %v1799, %v1564
      %v1865 = vsel %vm1841, %v1800, %v1566
      %v1866 = vsel %vm1841, %v1801, %v1568
      %v1867 = vsel %vm1841, %v1802, %v1570
      %v1868 = vsel %vm1841, %v1803, %v1572
      %v1869 = vsel %vm1841, %v1804, %v1574
      %v1870 = vsel %vm1841, %v1805, %v1576
      %v1871 = vsel %vm1841, %v1806, %v1578
      %v1872 = vsel %vm1841, %v1807, %v1580
      %v1873 = vsel %vm1841, %v1808, %v1582
      %v1874 = vsel %vm1841, %v1809, %v1584
      %v1875 = vsel %vm1841, %v1810, %v1586
      %v1876 = vsel %vm1841, %v1811, %v1588
      %v1877 = vsel %vm1841, %v1812, %v1590
      %v1878 = vsel %vm1841, %v1813, %v1592
      %v1879 = vsel %vm1841, %v1814, %v1594
      %v1880 = vsel %vm1841, %v1815, %v1596
      %v1881 = vsel %vm1841, %v1816, %v1598
      %v1882 = vsel %vm1841, %v1817, %v1600
      %v1883 = vsel %vm1841, %v1818, %v1602
      %v1884 = vsel %vm1841, %v1819, %v1604
      %v1885 = vsel %vm1841, %v1820, %v1606
      %v1886 = vsel %vm1841, %v1821, %v1608
      %v1887 = vsel %vm1841, %v1822, %v1610
      %v1888 = vsel %vm1841, %v1823, %v1612
      %v1889 = vsel %vm1841, %v1824, %v1614
      %v1890 = vsel %vm1841, %v1825, %v1616
      %v1891 = vsel %vm1841, %v1826, %v1618
      %v1892 = vsel %vm1841, %v1827, %v1620
      %v1893 = vsel %vm1841, %v1828, %v1622
      %v1894 = vsel %vm1841, %v1829, %v1624
      %v1895 = vsel %vm1841, %v1830, %v1626
      %v1896 = vsel %vm1841, %v1831, %v1628
      %v1897 = vsel %vm1841, %v1832, %v1630
      %v1898 = vsel %vm1841, %v1833, %v1632
      %v1899 = vsel %vm1841, %v1834, %v1634
      %v1900 = vsel %vm1841, %v1835, %v1636
      %v1901 = vsel %vm1841, %v1836, %v1638
      %v1902 = vsel %vm1841, %v1837, %v1640
      %v1903 = vsel %vm1841, %v1838, %v1642
      %v1904 = vsel %vm1841, %v1839, %v1644
      %v1905 = vsel %vm1841, %v1840, %v1646
      %v1906 = vpack.c.bf16 %v1843, %v1842
      %v1907 = vpack.c.bf16 %v940, %v941
      %v1908 = vpack.c.bf16 %v1845, %v1844
      %v1909 = vpack.c.bf16 %v938, %v939
      %v1910 = vpack.c.bf16 %v1847, %v1846
      %v1911 = vpack.c.bf16 %v936, %v937
      %v1912 = vpack.c.bf16 %v1849, %v1848
      %v1913 = vpack.c.bf16 %v934, %v935
      %v1914 = vpack.c.bf16 %v1851, %v1850
      %v1915 = vpack.c.bf16 %v932, %v933
      %v1916 = vpack.c.bf16 %v1853, %v1852
      %v1917 = vpack.c.bf16 %v930, %v931
      %v1918 = vpack.c.bf16 %v1855, %v1854
      %v1919 = vpack.c.bf16 %v928, %v929
      %v1920 = vpack.c.bf16 %v1857, %v1856
      %v1921 = vpack.c.bf16 %v926, %v927
      %v1922 = vpack.c.bf16 %v1859, %v1858
      %v1923 = vpack.c.bf16 %v924, %v925
      %v1924 = vpack.c.bf16 %v1861, %v1860
      %v1925 = vpack.c.bf16 %v922, %v923
      %v1926 = vpack.c.bf16 %v1863, %v1862
      %v1927 = vpack.c.bf16 %v920, %v921
      %v1928 = vpack.c.bf16 %v1865, %v1864
      %v1929 = vpack.c.bf16 %v918, %v919
      %v1930 = vpack.c.bf16 %v1867, %v1866
      %v1931 = vpack.c.bf16 %v916, %v917
      %v1932 = vpack.c.bf16 %v1869, %v1868
      %v1933 = vpack.c.bf16 %v914, %v915
      %v1934 = vpack.c.bf16 %v1871, %v1870
      %v1935 = vpack.c.bf16 %v912, %v913
      %v1936 = vpack.c.bf16 %v1873, %v1872
      %v1937 = vpack.c.bf16 %v910, %v911
      %v1938 = vpack.c.bf16 %v1875, %v1874
      %v1939 = vpack.c.bf16 %v908, %v909
      %v1940 = vpack.c.bf16 %v1877, %v1876
      %v1941 = vpack.c.bf16 %v906, %v907
      %v1942 = vpack.c.bf16 %v1879, %v1878
      %v1943 = vpack.c.bf16 %v904, %v905
      %v1944 = vpack.c.bf16 %v1881, %v1880
      %v1945 = vpack.c.bf16 %v902, %v903
      %v1946 = vpack.c.bf16 %v1883, %v1882
      %v1947 = vpack.c.bf16 %v900, %v901
      %v1948 = vpack.c.bf16 %v1885, %v1884
      %v1949 = vpack.c.bf16 %v898, %v899
      %v1950 = vpack.c.bf16 %v1887, %v1886
      %v1951 = vpack.c.bf16 %v896, %v897
      %v1952 = vpack.c.bf16 %v1889, %v1888
      %v1953 = vpack.c.bf16 %v894, %v895
      %v1954 = vpack.c.bf16 %v1891, %v1890
      %v1955 = vpack.c.bf16 %v892, %v893
      %v1956 = vpack.c.bf16 %v1893, %v1892
      %v1957 = vpack.c.bf16 %v890, %v891
      %v1958 = vpack.c.bf16 %v1895, %v1894
      %v1959 = vpack.c.bf16 %v888, %v889
      %v1960 = vpack.c.bf16 %v1897, %v1896
      %v1961 = vpack.c.bf16 %v886, %v887
      %v1962 = vpack.c.bf16 %v1899, %v1898
      %v1963 = vpack.c.bf16 %v884, %v885
      %v1964 = vpack.c.bf16 %v1901, %v1900
      %v1965 = vpack.c.bf16 %v882, %v883
      %v1966 = vpack.c.bf16 %v1903, %v1902
      %v1967 = vpack.c.bf16 %v880, %v881
      %v1968 = vpack.c.bf16 %v1905, %v1904
      %v1969 = vpack.c.bf16 %v942, %v879
      %v1970 = vld [vmem:[%s1] sm:$0xf]
      %v1971 = vld [vmem:[%s1 + $0x4] sm:$0xf]
      %v1972 = vld [vmem:[%s1 + $0x8] sm:$0xf]
      %v1973 = vld [vmem:[%s1 + $0xc] sm:$0xf]
      %v1974 = vld [vmem:[%s1 + $0x10] sm:$0xf]
      %v1975 = vld [vmem:[%s1 + $0x14] sm:$0xf]
      %v1976 = vld [vmem:[%s1 + $0x18] sm:$0xf]
      %v1977 = vld [vmem:[%s1 + $0x1c] sm:$0xf]
      %v1978 = vld [vmem:[%s1 + $0x20] sm:$0xf]
      %v1979 = vld [vmem:[%s1 + $0x24] sm:$0xf]
      %v1980 = vld [vmem:[%s1 + $0x28] sm:$0xf]
      %v1981 = vld [vmem:[%s1 + $0x2c] sm:$0xf]
      %v1982 = vld [vmem:[%s1 + $0x30] sm:$0xf]
      %v1983 = vld [vmem:[%s1 + $0x34] sm:$0xf]
      %v1984 = vld [vmem:[%s1 + $0x38] sm:$0xf]
      %v1985 = vld [vmem:[%s1 + $0x3c] sm:$0xf]
      %v1986 = vld [vmem:[%s1 + $0x40] sm:$0xf]
      %v1987 = vld [vmem:[%s1 + $0x44] sm:$0xf]
      %v1988 = vld [vmem:[%s1 + $0x48] sm:$0xf]
      %v1989 = vld [vmem:[%s1 + $0x4c] sm:$0xf]
      %v1990 = vld [vmem:[%s2] sm:$0x1]
      %v1992 = vlaneseq
      %v1993 = vshrl.u32 %v1992, 7
      %v1994 = vsub.s32 0, %v1993
      %v1995 = vrot.slane %v1990, %v1994
      %v2017 = vunpack.c.l.b16 %v1970
      %v2018 = vunpack.c.l.b16 %v1971
      %v2019 = vunpack.c.l.b16 %v1972
      %v2020 = vunpack.c.l.b16 %v1973
      %v2021 = vunpack.c.l.b16 %v1974
      %v2022 = vunpack.c.l.b16 %v1975
      %v2023 = vunpack.c.l.b16 %v1976
      %v2024 = vunpack.c.l.b16 %v1977
      %v2025 = vunpack.c.l.b16 %v1978
      %v2026 = vunpack.c.l.b16 %v1979
      %v2027 = vunpack.c.l.b16 %v1980
      %v2028 = vunpack.c.l.b16 %v1981
      %v2029 = vunpack.c.l.b16 %v1982
      %v2030 = vunpack.c.l.b16 %v1983
      %v2031 = vunpack.c.l.b16 %v1984
      %v2032 = vunpack.c.l.b16 %v1985
      %v2033 = vunpack.c.l.b16 %v1986
      %v2034 = vunpack.c.l.b16 %v1987
      %v2035 = vunpack.c.l.b16 %v1988
      %v2036 = vunpack.c.l.b16 %v1989
      %v2037 = vpack.c.b16 %v2018, %v2017
      %v2038 = vpack.c.b16 %v2020, %v2019
      %v2039 = vpack.c.b16 %v2022, %v2021
      %v2040 = vpack.c.b16 %v2024, %v2023
      %v2041 = vpack.c.b16 %v2026, %v2025
      %v2042 = vpack.c.b16 %v2028, %v2027
      %v2043 = vpack.c.b16 %v2030, %v2029
      %v2044 = vpack.c.b16 %v2032, %v2031
      %v2045 = vpack.c.b16 %v2034, %v2033
      %v2046 = vpack.c.b16 %v2036, %v2035
      %v2058 = vsel %vm1711, %v1907, 0
      %v2061 = vsel %vm1711, %v1909, 0
      %v2064 = vsel %vm1711, %v1911, 0
      %v2067 = vsel %vm1711, %v1913, 0
      %v2070 = vsel %vm1711, %v1915, 0
      %v2073 = vsel %vm1711, %v1917, 0
      %v2076 = vsel %vm1711, %v1919, 0
      %v2079 = vsel %vm1711, %v1921, 0
      %v2082 = vsel %vm1711, %v1923, 0
      %v2085 = vsel %vm1711, %v1925, 0
      %v2088 = vsel %vm1711, %v1927, 0
      %v2091 = vsel %vm1711, %v1929, 0
      %v2094 = vsel %vm1711, %v1931, 0
      %v2097 = vsel %vm1711, %v1933, 0
      %v2100 = vsel %vm1711, %v1935, 0
      %v2103 = vsel %vm1711, %v1937, 0
      %v2106 = vsel %vm1711, %v1939, 0
      %v2109 = vsel %vm1711, %v1941, 0
      %v2112 = vsel %vm1711, %v1943, 0
      %v2115 = vsel %vm1711, %v1945, 0
      %v2118 = vsel %vm1711, %v1947, 0
      %v2121 = vsel %vm1711, %v1949, 0
      %v2124 = vsel %vm1711, %v1951, 0
      %v2127 = vsel %vm1711, %v1953, 0
      %v2130 = vsel %vm1711, %v1955, 0
      %v2133 = vsel %vm1711, %v1957, 0
      %v2136 = vsel %vm1711, %v1959, 0
      %v2139 = vsel %vm1711, %v1961, 0
      %v2142 = vsel %vm1711, %v1963, 0
      %v2145 = vsel %vm1711, %v1965, 0
      %v2148 = vsel %vm1711, %v1967, 0
      %v2151 = vsel %vm1711, %v1969, 0
      %2153 = vmatprep.subr.bf16.mxu0 0
      %2154 = vmatpush1.bf16.msra.mxu0 %v2037
      %2155 = vmatprep.subr.bf16.mxu0 0
      %2156 = vmatpush1.bf16.msra.mxu0 %v2038
      %2157 = vmatprep.subr.bf16.mxu0 0
      %2158 = vmatpush1.bf16.msra.mxu0 %v2039
      %2159 = vmatprep.subr.bf16.mxu0 0
      %2160 = vmatpush1.bf16.msra.mxu0 %v2040
      %2161 = vmatprep.subr.bf16.mxu0 0
      %2162 = vmatpush1.bf16.msra.mxu0 %v2041
      %2163 = vmatprep.subr.bf16.mxu0 0
      %2164 = vmatpush1.bf16.msra.mxu0 %v2042
      %2165 = vmatprep.subr.bf16.mxu0 0
      %2166 = vmatpush1.bf16.msra.mxu0 %v2043
      %2167 = vmatprep.subr.bf16.mxu0 0
      %2168 = vmatpush1.bf16.msra.mxu0 %v2044
      %2169 = vmatprep.subr.bf16.mxu0 0
      %2170 = vmatpush1.bf16.msra.mxu0 %v2045
      %2171 = vmatprep.subr.bf16.mxu0 0
      %2172 = vmatpush1.bf16.msra.mxu0 %v2046
      %2173 = vmatprep.subr.bf16.mxu0 0
      %2174 = vmatpush1.bf16.msra.mxu0 0
      %2175 = vmatprep.subr.bf16.mxu0 0
      %2176 = vmatpush1.bf16.msra.mxu0 0
      %2177 = vmatprep.subr.bf16.mxu0 0
      %2178 = vmatpush1.bf16.msra.mxu0 0
      %2179 = vmatprep.subr.bf16.mxu0 0
      %2180 = vmatpush1.bf16.msra.mxu0 0
      %2181 = vmatprep.subr.bf16.mxu0 0
      %2182 = vmatpush1.bf16.msra.mxu0 0
      %2183 = vmatprep.subr.bf16.mxu0 0
      %2184 = vmatpush1.bf16.msra.mxu0 0
      %2185 = vmatprep.mubr.bf16.mxu0 %v2058
      %2186 = vmatmul.mubr.bf16.gmra.mrb[0].mxu0 %v1906
      %v2187 = vpop.f32.mrb[0].mxu0
      %v2188 = vadd.f32 %v1995, %v2187
      %v2189 = vpop.f32.mrb[0].mxu0
      %v2190 = vpop.f32.mrb[0].mxu0
      %v2191 = vadd.f32 %v1995, %v2190
      %v2192 = vpop.f32.mrb[0].mxu0
      %2193 = vmatprep.mubr.bf16.mxu0 %v2061
      %2194 = vmatmul.mubr.bf16.gmra.mrb[0].mxu0 %v1908
      %v2195 = vpop.f32.mrb[0].mxu0
      %v2196 = vadd.f32 %v1995, %v2195
      %v2197 = vpop.f32.mrb[0].mxu0
      %v2198 = vpop.f32.mrb[0].mxu0
      %v2199 = vadd.f32 %v1995, %v2198
      %v2200 = vpop.f32.mrb[0].mxu0
      %2201 = vmatprep.mubr.bf16.mxu0 %v2064
      %2202 = vmatmul.mubr.bf16.gmra.mrb[0].mxu0 %v1910
      %v2203 = vpop.f32.mrb[0].mxu0
      %v2204 = vadd.f32 %v1995, %v2203
      %v2205 = vpop.f32.mrb[0].mxu0
      %v2206 = vpop.f32.mrb[0].mxu0
      %v2207 = vadd.f32 %v1995, %v2206
      %v2208 = vpop.f32.mrb[0].mxu0
      %2209 = vmatprep.mubr.bf16.mxu0 %v2067
      %2210 = vmatmul.mubr.bf16.gmra.mrb[0].mxu0 %v1912
      %v2211 = vpop.f32.mrb[0].mxu0
      %v2212 = vadd.f32 %v1995, %v2211
      %v2213 = vpop.f32.mrb[0].mxu0
      %v2214 = vpop.f32.mrb[0].mxu0
      %v2215 = vadd.f32 %v1995, %v2214
      %v2216 = vpop.f32.mrb[0].mxu0
      %2217 = vmatprep.mubr.bf16.mxu0 %v2070
      %2218 = vmatmul.mubr.bf16.gmra.mrb[0].mxu0 %v1914
      %v2219 = vpop.f32.mrb[0].mxu0
      %v2220 = vadd.f32 %v1995, %v2219
      %v2221 = vpop.f32.mrb[0].mxu0
      %v2222 = vpop.f32.mrb[0].mxu0
      %v2223 = vadd.f32 %v1995, %v2222
      %v2224 = vpop.f32.mrb[0].mxu0
      %2225 = vmatprep.mubr.bf16.mxu0 %v2073
      %2226 = vmatmul.mubr.bf16.gmra.mrb[0].mxu0 %v1916
      %v2227 = vpop.f32.mrb[0].mxu0
      %v2228 = vadd.f32 %v1995, %v2227
      %v2229 = vpop.f32.mrb[0].mxu0
      %v2230 = vpop.f32.mrb[0].mxu0
      %v2231 = vadd.f32 %v1995, %v2230
      %v2232 = vpop.f32.mrb[0].mxu0
      %2233 = vmatprep.mubr.bf16.mxu0 %v2076
      %2234 = vmatmul.mubr.bf16.gmra.mrb[0].mxu0 %v1918
      %v2235 = vpop.f32.mrb[0].mxu0
      %v2236 = vadd.f32 %v1995, %v2235
      %v2237 = vpop.f32.mrb[0].mxu0
      %v2238 = vpop.f32.mrb[0].mxu0
      %v2239 = vadd.f32 %v1995, %v2238
      %v2240 = vpop.f32.mrb[0].mxu0
      %2241 = vmatprep.mubr.bf16.mxu0 %v2079
      %2242 = vmatmul.mubr.bf16.gmra.mrb[0].mxu0 %v1920
      %v2243 = vpop.f32.mrb[0].mxu0
      %v2244 = vadd.f32 %v1995, %v2243
      %v2245 = vpop.f32.mrb[0].mxu0
      %v2246 = vpop.f32.mrb[0].mxu0
      %v2247 = vadd.f32 %v1995, %v2246
      %v2248 = vpop.f32.mrb[0].mxu0
      %2249 = vmatprep.mubr.bf16.mxu0 %v2082
      %2250 = vmatmul.mubr.bf16.gmra.mrb[0].mxu0 %v1922
      %v2251 = vpop.f32.mrb[0].mxu0
      %v2252 = vadd.f32 %v1995, %v2251
      %v2253 = vpop.f32.mrb[0].mxu0
      %v2254 = vpop.f32.mrb[0].mxu0
      %v2255 = vadd.f32 %v1995, %v2254
      %v2256 = vpop.f32.mrb[0].mxu0
      %2257 = vmatprep.mubr.bf16.mxu0 %v2085
      %2258 = vmatmul.mubr.bf16.gmra.mrb[0].mxu0 %v1924
      %v2259 = vpop.f32.mrb[0].mxu0
      %v2260 = vadd.f32 %v1995, %v2259
      %v2261 = vpop.f32.mrb[0].mxu0
      %v2262 = vpop.f32.mrb[0].mxu0
      %v2263 = vadd.f32 %v1995, %v2262
      %v2264 = vpop.f32.mrb[0].mxu0
      %2265 = vmatprep.mubr.bf16.mxu0 %v2088
      %2266 = vmatmul.mubr.bf16.gmra.mrb[0].mxu0 %v1926
      %v2267 = vpop.f32.mrb[0].mxu0
      %v2268 = vadd.f32 %v1995, %v2267
      %v2269 = vpop.f32.mrb[0].mxu0
      %v2270 = vpop.f32.mrb[0].mxu0
      %v2271 = vadd.f32 %v1995, %v2270
      %v2272 = vpop.f32.mrb[0].mxu0
      %2273 = vmatprep.mubr.bf16.mxu0 %v2091
      %2274 = vmatmul.mubr.bf16.gmra.mrb[0].mxu0 %v1928
      %v2275 = vpop.f32.mrb[0].mxu0
      %v2276 = vadd.f32 %v1995, %v2275
      %v2277 = vpop.f32.mrb[0].mxu0
      %v2278 = vpop.f32.mrb[0].mxu0
      %v2279 = vadd.f32 %v1995, %v2278
      %v2280 = vpop.f32.mrb[0].mxu0
      %2281 = vmatprep.mubr.bf16.mxu0 %v2094
      %2282 = vmatmul.mubr.bf16.gmra.mrb[0].mxu0 %v1930
      %v2283 = vpop.f32.mrb[0].mxu0
      %v2284 = vadd.f32 %v1995, %v2283
      %v2285 = vpop.f32.mrb[0].mxu0
      %v2286 = vpop.f32.mrb[0].mxu0
      %v2287 = vadd.f32 %v1995, %v2286
      %v2288 = vpop.f32.mrb[0].mxu0
      %2289 = vmatprep.mubr.bf16.mxu0 %v2097
      %2290 = vmatmul.mubr.bf16.gmra.mrb[0].mxu0 %v1932
      %v2291 = vpop.f32.mrb[0].mxu0
      %v2292 = vadd.f32 %v1995, %v2291
      %v2293 = vpop.f32.mrb[0].mxu0
      %v2294 = vpop.f32.mrb[0].mxu0
      %v2295 = vadd.f32 %v1995, %v2294
      %v2296 = vpop.f32.mrb[0].mxu0
      %2297 = vmatprep.mubr.bf16.mxu0 %v2100
      %2298 = vmatmul.mubr.bf16.gmra.mrb[0].mxu0 %v1934
      %v2299 = vpop.f32.mrb[0].mxu0
      %v2300 = vadd.f32 %v1995, %v2299
      %v2301 = vpop.f32.mrb[0].mxu0
      %v2302 = vpop.f32.mrb[0].mxu0
      %v2303 = vadd.f32 %v1995, %v2302
      %v2304 = vpop.f32.mrb[0].mxu0
      %2305 = vmatprep.mubr.bf16.mxu0 %v2103
      %2306 = vmatmul.mubr.bf16.gmra.mrb[0].mxu0 %v1936
      %v2307 = vpop.f32.mrb[0].mxu0
      %v2308 = vadd.f32 %v1995, %v2307
      %v2309 = vpop.f32.mrb[0].mxu0
      %v2310 = vpop.f32.mrb[0].mxu0
      %v2311 = vadd.f32 %v1995, %v2310
      %v2312 = vpop.f32.mrb[0].mxu0
      %2313 = vmatprep.mubr.bf16.mxu0 %v2106
      %2314 = vmatmul.mubr.bf16.gmra.mrb[0].mxu0 %v1938
      %v2315 = vpop.f32.mrb[0].mxu0
      %v2316 = vadd.f32 %v1995, %v2315
      %v2317 = vpop.f32.mrb[0].mxu0
      %v2318 = vpop.f32.mrb[0].mxu0
      %v2319 = vadd.f32 %v1995, %v2318
      %v2320 = vpop.f32.mrb[0].mxu0
      %2321 = vmatprep.mubr.bf16.mxu0 %v2109
      %2322 = vmatmul.mubr.bf16.gmra.mrb[0].mxu0 %v1940
      %v2323 = vpop.f32.mrb[0].mxu0
      %v2324 = vadd.f32 %v1995, %v2323
      %v2325 = vpop.f32.mrb[0].mxu0
      %v2326 = vpop.f32.mrb[0].mxu0
      %v2327 = vadd.f32 %v1995, %v2326
      %v2328 = vpop.f32.mrb[0].mxu0
      %2329 = vmatprep.mubr.bf16.mxu0 %v2112
      %2330 = vmatmul.mubr.bf16.gmra.mrb[0].mxu0 %v1942
      %v2331 = vpop.f32.mrb[0].mxu0
      %v2332 = vadd.f32 %v1995, %v2331
      %v2333 = vpop.f32.mrb[0].mxu0
      %v2334 = vpop.f32.mrb[0].mxu0
      %v2335 = vadd.f32 %v1995, %v2334
      %v2336 = vpop.f32.mrb[0].mxu0
      %2337 = vmatprep.mubr.bf16.mxu0 %v2115
      %2338 = vmatmul.mubr.bf16.gmra.mrb[0].mxu0 %v1944
      %v2339 = vpop.f32.mrb[0].mxu0
      %v2340 = vadd.f32 %v1995, %v2339
      %v2341 = vpop.f32.mrb[0].mxu0
      %v2342 = vpop.f32.mrb[0].mxu0
      %v2343 = vadd.f32 %v1995, %v2342
      %v2344 = vpop.f32.mrb[0].mxu0
      %2345 = vmatprep.mubr.bf16.mxu0 %v2118
      %2346 = vmatmul.mubr.bf16.gmra.mrb[0].mxu0 %v1946
      %v2347 = vpop.f32.mrb[0].mxu0
      %v2348 = vadd.f32 %v1995, %v2347
      %v2349 = vpop.f32.mrb[0].mxu0
      %v2350 = vpop.f32.mrb[0].mxu0
      %v2351 = vadd.f32 %v1995, %v2350
      %v2352 = vpop.f32.mrb[0].mxu0
      %2353 = vmatprep.mubr.bf16.mxu0 %v2121
      %2354 = vmatmul.mubr.bf16.gmra.mrb[0].mxu0 %v1948
      %v2355 = vpop.f32.mrb[0].mxu0
      %v2356 = vadd.f32 %v1995, %v2355
      %v2357 = vpop.f32.mrb[0].mxu0
      %v2358 = vpop.f32.mrb[0].mxu0
      %v2359 = vadd.f32 %v1995, %v2358
      %v2360 = vpop.f32.mrb[0].mxu0
      %2361 = vmatprep.mubr.bf16.mxu0 %v2124
      %2362 = vmatmul.mubr.bf16.gmra.mrb[0].mxu0 %v1950
      %v2363 = vpop.f32.mrb[0].mxu0
      %v2364 = vadd.f32 %v1995, %v2363
      %v2365 = vpop.f32.mrb[0].mxu0
      %v2366 = vpop.f32.mrb[0].mxu0
      %v2367 = vadd.f32 %v1995, %v2366
      %v2368 = vpop.f32.mrb[0].mxu0
      %2369 = vmatprep.mubr.bf16.mxu0 %v2127
      %2370 = vmatmul.mubr.bf16.gmra.mrb[0].mxu0 %v1952
      %v2371 = vpop.f32.mrb[0].mxu0
      %v2372 = vadd.f32 %v1995, %v2371
      %v2373 = vpop.f32.mrb[0].mxu0
      %v2374 = vpop.f32.mrb[0].mxu0
      %v2375 = vadd.f32 %v1995, %v2374
      %v2376 = vpop.f32.mrb[0].mxu0
      %2377 = vmatprep.mubr.bf16.mxu0 %v2130
      %2378 = vmatmul.mubr.bf16.gmra.mrb[0].mxu0 %v1954
      %v2379 = vpop.f32.mrb[0].mxu0
      %v2380 = vadd.f32 %v1995, %v2379
      %v2381 = vpop.f32.mrb[0].mxu0
      %v2382 = vpop.f32.mrb[0].mxu0
      %v2383 = vadd.f32 %v1995, %v2382
      %v2384 = vpop.f32.mrb[0].mxu0
      %2385 = vmatprep.mubr.bf16.mxu0 %v2133
      %2386 = vmatmul.mubr.bf16.gmra.mrb[0].mxu0 %v1956
      %v2387 = vpop.f32.mrb[0].mxu0
      %v2388 = vadd.f32 %v1995, %v2387
      %v2389 = vpop.f32.mrb[0].mxu0
      %v2390 = vpop.f32.mrb[0].mxu0
      %v2391 = vadd.f32 %v1995, %v2390
      %v2392 = vpop.f32.mrb[0].mxu0
      %2393 = vmatprep.mubr.bf16.mxu0 %v2136
      %2394 = vmatmul.mubr.bf16.gmra.mrb[0].mxu0 %v1958
      %v2395 = vpop.f32.mrb[0].mxu0
      %v2396 = vadd.f32 %v1995, %v2395
      %v2397 = vpop.f32.mrb[0].mxu0
      %v2398 = vpop.f32.mrb[0].mxu0
      %v2399 = vadd.f32 %v1995, %v2398
      %v2400 = vpop.f32.mrb[0].mxu0
      %2401 = vmatprep.mubr.bf16.mxu0 %v2139
      %2402 = vmatmul.mubr.bf16.gmra.mrb[0].mxu0 %v1960
      %v2403 = vpop.f32.mrb[0].mxu0
      %v2404 = vadd.f32 %v1995, %v2403
      %v2405 = vpop.f32.mrb[0].mxu0
      %v2406 = vpop.f32.mrb[0].mxu0
      %v2407 = vadd.f32 %v1995, %v2406
      %v2408 = vpop.f32.mrb[0].mxu0
      %2409 = vmatprep.mubr.bf16.mxu0 %v2142
      %2410 = vmatmul.mubr.bf16.gmra.mrb[0].mxu0 %v1962
      %v2411 = vpop.f32.mrb[0].mxu0
      %v2412 = vadd.f32 %v1995, %v2411
      %v2413 = vpop.f32.mrb[0].mxu0
      %v2414 = vpop.f32.mrb[0].mxu0
      %v2415 = vadd.f32 %v1995, %v2414
      %v2416 = vpop.f32.mrb[0].mxu0
      %2417 = vmatprep.mubr.bf16.mxu0 %v2145
      %2418 = vmatmul.mubr.bf16.gmra.mrb[0].mxu0 %v1964
      %v2419 = vpop.f32.mrb[0].mxu0
      %v2420 = vadd.f32 %v1995, %v2419
      %v2421 = vpop.f32.mrb[0].mxu0
      %v2422 = vpop.f32.mrb[0].mxu0
      %v2423 = vadd.f32 %v1995, %v2422
      %v2424 = vpop.f32.mrb[0].mxu0
      %2425 = vmatprep.mubr.bf16.mxu0 %v2148
      %2426 = vmatmul.mubr.bf16.gmra.mrb[0].mxu0 %v1966
      %v2427 = vpop.f32.mrb[0].mxu0
      %v2428 = vadd.f32 %v1995, %v2427
      %v2429 = vpop.f32.mrb[0].mxu0
      %v2430 = vpop.f32.mrb[0].mxu0
      %v2431 = vadd.f32 %v1995, %v2430
      %v2432 = vpop.f32.mrb[0].mxu0
      %2433 = vmatprep.mubr.bf16.mxu0 %v2151
      %2434 = vmatmul.mubr.bf16.gmra.mrb[0].mxu0 %v1968
      %v2435 = vpop.f32.mrb[0].mxu0
      %v2436 = vadd.f32 %v1995, %v2435
      %v2437 = vpop.f32.mrb[0].mxu0
      %v2438 = vpop.f32.mrb[0].mxu0
      %v2439 = vadd.f32 %v1995, %v2438
      %v2440 = vpop.f32.mrb[0].mxu0
      %2441 = vdwg.mxu0
      %v2442 = vmax.f32 %v2188, 0.0
      %v2443 = vmax.f32 %v2191, 0.0
      %v2444 = vmax.f32 %v2196, 0.0
      %v2445 = vmax.f32 %v2199, 0.0
      %v2446 = vmax.f32 %v2204, 0.0
      %v2447 = vmax.f32 %v2207, 0.0
      %v2448 = vmax.f32 %v2212, 0.0
      %v2449 = vmax.f32 %v2215, 0.0
      %v2450 = vmax.f32 %v2220, 0.0
      %v2451 = vmax.f32 %v2223, 0.0
      %v2452 = vmax.f32 %v2228, 0.0
      %v2453 = vmax.f32 %v2231, 0.0
      %v2454 = vmax.f32 %v2236, 0.0
      %v2455 = vmax.f32 %v2239, 0.0
      %v2456 = vmax.f32 %v2244, 0.0
      %v2457 = vmax.f32 %v2247, 0.0
      %v2458 = vmax.f32 %v2252, 0.0
      %v2459 = vmax.f32 %v2255, 0.0
      %v2460 = vmax.f32 %v2260, 0.0
      %v2461 = vmax.f32 %v2263, 0.0
      %v2462 = vmax.f32 %v2268, 0.0
      %v2463 = vmax.f32 %v2271, 0.0
      %v2464 = vmax.f32 %v2276, 0.0
      %v2465 = vmax.f32 %v2279, 0.0
      %v2466 = vmax.f32 %v2284, 0.0
      %v2467 = vmax.f32 %v2287, 0.0
      %v2468 = vmax.f32 %v2292, 0.0
      %v2469 = vmax.f32 %v2295, 0.0
      %v2470 = vmax.f32 %v2300, 0.0
      %v2471 = vmax.f32 %v2303, 0.0
      %v2472 = vmax.f32 %v2308, 0.0
      %v2473 = vmax.f32 %v2311, 0.0
      %v2474 = vmax.f32 %v2316, 0.0
      %v2475 = vmax.f32 %v2319, 0.0
      %v2476 = vmax.f32 %v2324, 0.0
      %v2477 = vmax.f32 %v2327, 0.0
      %v2478 = vmax.f32 %v2332, 0.0
      %v2479 = vmax.f32 %v2335, 0.0
      %v2480 = vmax.f32 %v2340, 0.0
      %v2481 = vmax.f32 %v2343, 0.0
      %v2482 = vmax.f32 %v2348, 0.0
      %v2483 = vmax.f32 %v2351, 0.0
      %v2484 = vmax.f32 %v2356, 0.0
      %v2485 = vmax.f32 %v2359, 0.0
      %v2486 = vmax.f32 %v2364, 0.0
      %v2487 = vmax.f32 %v2367, 0.0
      %v2488 = vmax.f32 %v2372, 0.0
      %v2489 = vmax.f32 %v2375, 0.0
      %v2490 = vmax.f32 %v2380, 0.0
      %v2491 = vmax.f32 %v2383, 0.0
      %v2492 = vmax.f32 %v2388, 0.0
      %v2493 = vmax.f32 %v2391, 0.0
      %v2494 = vmax.f32 %v2396, 0.0
      %v2495 = vmax.f32 %v2399, 0.0
      %v2496 = vmax.f32 %v2404, 0.0
      %v2497 = vmax.f32 %v2407, 0.0
      %v2498 = vmax.f32 %v2412, 0.0
      %v2499 = vmax.f32 %v2415, 0.0
      %v2500 = vmax.f32 %v2420, 0.0
      %v2501 = vmax.f32 %v2423, 0.0
      %v2502 = vmax.f32 %v2428, 0.0
      %v2503 = vmax.f32 %v2431, 0.0
      %v2504 = vmax.f32 %v2436, 0.0
      %v2505 = vmax.f32 %v2439, 0.0
      %v2506 = vld [vmem:[%s3] sm:$0xff]
      %v2507 = vld [vmem:[%s3 + $0x8] sm:$0xff]
      %v2508 = vmul.f32 %v2442, %v2506
      %v2509 = vmul.f32 %v2443, %v2507
      %v2510 = vmul.f32 %v2444, %v2506
      %v2511 = vmul.f32 %v2445, %v2507
      %v2512 = vmul.f32 %v2446, %v2506
      %v2513 = vmul.f32 %v2447, %v2507
      %v2514 = vmul.f32 %v2448, %v2506
      %v2515 = vmul.f32 %v2449, %v2507
      %v2516 = vmul.f32 %v2450, %v2506
      %v2517 = vmul.f32 %v2451, %v2507
      %v2518 = vmul.f32 %v2452, %v2506
      %v2519 = vmul.f32 %v2453, %v2507
      %v2520 = vmul.f32 %v2454, %v2506
      %v2521 = vmul.f32 %v2455, %v2507
      %v2522 = vmul.f32 %v2456, %v2506
      %v2523 = vmul.f32 %v2457, %v2507
      %v2524 = vmul.f32 %v2458, %v2506
      %v2525 = vmul.f32 %v2459, %v2507
      %v2526 = vmul.f32 %v2460, %v2506
      %v2527 = vmul.f32 %v2461, %v2507
      %v2528 = vmul.f32 %v2462, %v2506
      %v2529 = vmul.f32 %v2463, %v2507
      %v2530 = vmul.f32 %v2464, %v2506
      %v2531 = vmul.f32 %v2465, %v2507
      %v2532 = vmul.f32 %v2466, %v2506
      %v2533 = vmul.f32 %v2467, %v2507
      %v2534 = vmul.f32 %v2468, %v2506
      %v2535 = vmul.f32 %v2469, %v2507
      %v2536 = vmul.f32 %v2470, %v2506
      %v2537 = vmul.f32 %v2471, %v2507
      %v2538 = vmul.f32 %v2472, %v2506
      %v2539 = vmul.f32 %v2473, %v2507
      %v2540 = vmul.f32 %v2474, %v2506
      %v2541 = vmul.f32 %v2475, %v2507
      %v2542 = vmul.f32 %v2476, %v2506
      %v2543 = vmul.f32 %v2477, %v2507
      %v2544 = vmul.f32 %v2478, %v2506
      %v2545 = vmul.f32 %v2479, %v2507
      %v2546 = vmul.f32 %v2480, %v2506
      %v2547 = vmul.f32 %v2481, %v2507
      %v2548 = vmul.f32 %v2482, %v2506
      %v2549 = vmul.f32 %v2483, %v2507
      %v2550 = vmul.f32 %v2484, %v2506
      %v2551 = vmul.f32 %v2485, %v2507
      %v2552 = vmul.f32 %v2486, %v2506
      %v2553 = vmul.f32 %v2487, %v2507
      %v2554 = vmul.f32 %v2488, %v2506
      %v2555 = vmul.f32 %v2489, %v2507
      %v2556 = vmul.f32 %v2490, %v2506
      %v2557 = vmul.f32 %v2491, %v2507
      %v2558 = vmul.f32 %v2492, %v2506
      %v2559 = vmul.f32 %v2493, %v2507
      %v2560 = vmul.f32 %v2494, %v2506
      %v2561 = vmul.f32 %v2495, %v2507
      %v2562 = vmul.f32 %v2496, %v2506
      %v2563 = vmul.f32 %v2497, %v2507
      %v2564 = vmul.f32 %v2498, %v2506
      %v2565 = vmul.f32 %v2499, %v2507
      %v2566 = vmul.f32 %v2500, %v2506
      %v2567 = vmul.f32 %v2501, %v2507
      %v2568 = vmul.f32 %v2502, %v2506
      %v2569 = vmul.f32 %v2503, %v2507
      %v2570 = vmul.f32 %v2504, %v2506
      %v2571 = vmul.f32 %v2505, %v2507
      %v2572 = vmax.f32 %v2508, %v2509
      %v2573 = vrot.slane %v2572, 4
      %v2574 = vmax.f32 %v2572, %v2573
      %v2575 = vrot.slane %v2574, 2
      %v2576 = vmax.f32 %v2574, %v2575
      %v2577 = vrot.slane %v2576, 1
      %v2578 = vmax.f32 %v2576, %v2577
      %v2579 = vmax.f32 %v2510, %v2511
      %v2580 = vrot.slane %v2579, 4
      %v2581 = vmax.f32 %v2579, %v2580
      %v2582 = vrot.slane %v2581, 2
      %v2583 = vmax.f32 %v2581, %v2582
      %v2584 = vrot.slane %v2583, 1
      %v2585 = vmax.f32 %v2583, %v2584
      %v2586 = vmax.f32 %v2512, %v2513
      %v2587 = vrot.slane %v2586, 4
      %v2588 = vmax.f32 %v2586, %v2587
      %v2589 = vrot.slane %v2588, 2
      %v2590 = vmax.f32 %v2588, %v2589
      %v2591 = vrot.slane %v2590, 1
      %v2592 = vmax.f32 %v2590, %v2591
      %v2593 = vmax.f32 %v2514, %v2515
      %v2594 = vrot.slane %v2593, 4
      %v2595 = vmax.f32 %v2593, %v2594
      %v2596 = vrot.slane %v2595, 2
      %v2597 = vmax.f32 %v2595, %v2596
      %v2598 = vrot.slane %v2597, 1
      %v2599 = vmax.f32 %v2597, %v2598
      %v2600 = vmax.f32 %v2516, %v2517
      %v2601 = vrot.slane %v2600, 4
      %v2602 = vmax.f32 %v2600, %v2601
      %v2603 = vrot.slane %v2602, 2
      %v2604 = vmax.f32 %v2602, %v2603
      %v2605 = vrot.slane %v2604, 1
      %v2606 = vmax.f32 %v2604, %v2605
      %v2607 = vmax.f32 %v2518, %v2519
      %v2608 = vrot.slane %v2607, 4
      %v2609 = vmax.f32 %v2607, %v2608
      %v2610 = vrot.slane %v2609, 2
      %v2611 = vmax.f32 %v2609, %v2610
      %v2612 = vrot.slane %v2611, 1
      %v2613 = vmax.f32 %v2611, %v2612
      %v2614 = vmax.f32 %v2520, %v2521
      %v2615 = vrot.slane %v2614, 4
      %v2616 = vmax.f32 %v2614, %v2615
      %v2617 = vrot.slane %v2616, 2
      %v2618 = vmax.f32 %v2616, %v2617
      %v2619 = vrot.slane %v2618, 1
      %v2620 = vmax.f32 %v2618, %v2619
      %v2621 = vmax.f32 %v2522, %v2523
      %v2622 = vrot.slane %v2621, 4
      %v2623 = vmax.f32 %v2621, %v2622
      %v2624 = vrot.slane %v2623, 2
      %v2625 = vmax.f32 %v2623, %v2624
      %v2626 = vrot.slane %v2625, 1
      %v2627 = vmax.f32 %v2625, %v2626
      %v2628 = vmax.f32 %v2524, %v2525
      %v2629 = vrot.slane %v2628, 4
      %v2630 = vmax.f32 %v2628, %v2629
      %v2631 = vrot.slane %v2630, 2
      %v2632 = vmax.f32 %v2630, %v2631
      %v2633 = vrot.slane %v2632, 1
      %v2634 = vmax.f32 %v2632, %v2633
      %v2635 = vmax.f32 %v2526, %v2527
      %v2636 = vrot.slane %v2635, 4
      %v2637 = vmax.f32 %v2635, %v2636
      %v2638 = vrot.slane %v2637, 2
      %v2639 = vmax.f32 %v2637, %v2638
      %v2640 = vrot.slane %v2639, 1
      %v2641 = vmax.f32 %v2639, %v2640
      %v2642 = vmax.f32 %v2528, %v2529
      %v2643 = vrot.slane %v2642, 4
      %v2644 = vmax.f32 %v2642, %v2643
      %v2645 = vrot.slane %v2644, 2
      %v2646 = vmax.f32 %v2644, %v2645
      %v2647 = vrot.slane %v2646, 1
      %v2648 = vmax.f32 %v2646, %v2647
      %v2649 = vmax.f32 %v2530, %v2531
      %v2650 = vrot.slane %v2649, 4
      %v2651 = vmax.f32 %v2649, %v2650
      %v2652 = vrot.slane %v2651, 2
      %v2653 = vmax.f32 %v2651, %v2652
      %v2654 = vrot.slane %v2653, 1
      %v2655 = vmax.f32 %v2653, %v2654
      %v2656 = vmax.f32 %v2532, %v2533
      %v2657 = vrot.slane %v2656, 4
      %v2658 = vmax.f32 %v2656, %v2657
      %v2659 = vrot.slane %v2658, 2
      %v2660 = vmax.f32 %v2658, %v2659
      %v2661 = vrot.slane %v2660, 1
      %v2662 = vmax.f32 %v2660, %v2661
      %v2663 = vmax.f32 %v2534, %v2535
      %v2664 = vrot.slane %v2663, 4
      %v2665 = vmax.f32 %v2663, %v2664
      %v2666 = vrot.slane %v2665, 2
      %v2667 = vmax.f32 %v2665, %v2666
      %v2668 = vrot.slane %v2667, 1
      %v2669 = vmax.f32 %v2667, %v2668
      %v2670 = vmax.f32 %v2536, %v2537
      %v2671 = vrot.slane %v2670, 4
      %v2672 = vmax.f32 %v2670, %v2671
      %v2673 = vrot.slane %v2672, 2
      %v2674 = vmax.f32 %v2672, %v2673
      %v2675 = vrot.slane %v2674, 1
      %v2676 = vmax.f32 %v2674, %v2675
      %v2677 = vmax.f32 %v2538, %v2539
      %v2678 = vrot.slane %v2677, 4
      %v2679 = vmax.f32 %v2677, %v2678
      %v2680 = vrot.slane %v2679, 2
      %v2681 = vmax.f32 %v2679, %v2680
      %v2682 = vrot.slane %v2681, 1
      %v2683 = vmax.f32 %v2681, %v2682
      %v2684 = vmax.f32 %v2540, %v2541
      %v2685 = vrot.slane %v2684, 4
      %v2686 = vmax.f32 %v2684, %v2685
      %v2687 = vrot.slane %v2686, 2
      %v2688 = vmax.f32 %v2686, %v2687
      %v2689 = vrot.slane %v2688, 1
      %v2690 = vmax.f32 %v2688, %v2689
      %v2691 = vmax.f32 %v2542, %v2543
      %v2692 = vrot.slane %v2691, 4
      %v2693 = vmax.f32 %v2691, %v2692
      %v2694 = vrot.slane %v2693, 2
      %v2695 = vmax.f32 %v2693, %v2694
      %v2696 = vrot.slane %v2695, 1
      %v2697 = vmax.f32 %v2695, %v2696
      %v2698 = vmax.f32 %v2544, %v2545
      %v2699 = vrot.slane %v2698, 4
      %v2700 = vmax.f32 %v2698, %v2699
      %v2701 = vrot.slane %v2700, 2
      %v2702 = vmax.f32 %v2700, %v2701
      %v2703 = vrot.slane %v2702, 1
      %v2704 = vmax.f32 %v2702, %v2703
      %v2705 = vmax.f32 %v2546, %v2547
      %v2706 = vrot.slane %v2705, 4
      %v2707 = vmax.f32 %v2705, %v2706
      %v2708 = vrot.slane %v2707, 2
      %v2709 = vmax.f32 %v2707, %v2708
      %v2710 = vrot.slane %v2709, 1
      %v2711 = vmax.f32 %v2709, %v2710
      %v2712 = vmax.f32 %v2548, %v2549
      %v2713 = vrot.slane %v2712, 4
      %v2714 = vmax.f32 %v2712, %v2713
      %v2715 = vrot.slane %v2714, 2
      %v2716 = vmax.f32 %v2714, %v2715
      %v2717 = vrot.slane %v2716, 1
      %v2718 = vmax.f32 %v2716, %v2717
      %v2719 = vmax.f32 %v2550, %v2551
      %v2720 = vrot.slane %v2719, 4
      %v2721 = vmax.f32 %v2719, %v2720
      %v2722 = vrot.slane %v2721, 2
      %v2723 = vmax.f32 %v2721, %v2722
      %v2724 = vrot.slane %v2723, 1
      %v2725 = vmax.f32 %v2723, %v2724
      %v2726 = vmax.f32 %v2552, %v2553
      %v2727 = vrot.slane %v2726, 4
      %v2728 = vmax.f32 %v2726, %v2727
      %v2729 = vrot.slane %v2728, 2
      %v2730 = vmax.f32 %v2728, %v2729
      %v2731 = vrot.slane %v2730, 1
      %v2732 = vmax.f32 %v2730, %v2731
      %v2733 = vmax.f32 %v2554, %v2555
      %v2734 = vrot.slane %v2733, 4
      %v2735 = vmax.f32 %v2733, %v2734
      %v2736 = vrot.slane %v2735, 2
      %v2737 = vmax.f32 %v2735, %v2736
      %v2738 = vrot.slane %v2737, 1
      %v2739 = vmax.f32 %v2737, %v2738
      %v2740 = vmax.f32 %v2556, %v2557
      %v2741 = vrot.slane %v2740, 4
      %v2742 = vmax.f32 %v2740, %v2741
      %v2743 = vrot.slane %v2742, 2
      %v2744 = vmax.f32 %v2742, %v2743
      %v2745 = vrot.slane %v2744, 1
      %v2746 = vmax.f32 %v2744, %v2745
      %v2747 = vmax.f32 %v2558, %v2559
      %v2748 = vrot.slane %v2747, 4
      %v2749 = vmax.f32 %v2747, %v2748
      %v2750 = vrot.slane %v2749, 2
      %v2751 = vmax.f32 %v2749, %v2750
      %v2752 = vrot.slane %v2751, 1
      %v2753 = vmax.f32 %v2751, %v2752
      %v2754 = vmax.f32 %v2560, %v2561
      %v2755 = vrot.slane %v2754, 4
      %v2756 = vmax.f32 %v2754, %v2755
      %v2757 = vrot.slane %v2756, 2
      %v2758 = vmax.f32 %v2756, %v2757
      %v2759 = vrot.slane %v2758, 1
      %v2760 = vmax.f32 %v2758, %v2759
      %v2761 = vmax.f32 %v2562, %v2563
      %v2762 = vrot.slane %v2761, 4
      %v2763 = vmax.f32 %v2761, %v2762
      %v2764 = vrot.slane %v2763, 2
      %v2765 = vmax.f32 %v2763, %v2764
      %v2766 = vrot.slane %v2765, 1
      %v2767 = vmax.f32 %v2765, %v2766
      %v2768 = vmax.f32 %v2564, %v2565
      %v2769 = vrot.slane %v2768, 4
      %v2770 = vmax.f32 %v2768, %v2769
      %v2771 = vrot.slane %v2770, 2
      %v2772 = vmax.f32 %v2770, %v2771
      %v2773 = vrot.slane %v2772, 1
      %v2774 = vmax.f32 %v2772, %v2773
      %v2775 = vmax.f32 %v2566, %v2567
      %v2776 = vrot.slane %v2775, 4
      %v2777 = vmax.f32 %v2775, %v2776
      %v2778 = vrot.slane %v2777, 2
      %v2779 = vmax.f32 %v2777, %v2778
      %v2780 = vrot.slane %v2779, 1
      %v2781 = vmax.f32 %v2779, %v2780
      %v2782 = vmax.f32 %v2568, %v2569
      %v2783 = vrot.slane %v2782, 4
      %v2784 = vmax.f32 %v2782, %v2783
      %v2785 = vrot.slane %v2784, 2
      %v2786 = vmax.f32 %v2784, %v2785
      %v2787 = vrot.slane %v2786, 1
      %v2788 = vmax.f32 %v2786, %v2787
      %v2789 = vmax.f32 %v2570, %v2571
      %v2790 = vrot.slane %v2789, 4
      %v2791 = vmax.f32 %v2789, %v2790
      %v2792 = vrot.slane %v2791, 2
      %v2793 = vmax.f32 %v2791, %v2792
      %v2794 = vrot.slane %v2793, 1
      %v2795 = vmax.f32 %v2793, %v2794
      %vm2828 = vcmask 1041409
      %v2829 = vsel %vm2828, %v2585, %v2578
      %vm2830 = vcmask 1042434
      %v2831 = vsel %vm2830, %v2592, %v2829
      %vm2832 = vcmask 1043459
      %v2833 = vsel %vm2832, %v2599, %v2831
      %vm2834 = vcmask 1044484
      %v2835 = vsel %vm2834, %v2606, %v2833
      %vm2836 = vcmask 1045509
      %v2837 = vsel %vm2836, %v2613, %v2835
      %vm2838 = vcmask 1046534
      %v2839 = vsel %vm2838, %v2620, %v2837
      %vm2840 = vcmask 1047559
      %v2841 = vsel %vm2840, %v2627, %v2839
      %v2842 = vsel %vm2828, %v2641, %v2634
      %v2843 = vsel %vm2830, %v2648, %v2842
      %v2844 = vsel %vm2832, %v2655, %v2843
      %v2845 = vsel %vm2834, %v2662, %v2844
      %v2846 = vsel %vm2836, %v2669, %v2845
      %v2847 = vsel %vm2838, %v2676, %v2846
      %v2848 = vsel %vm2840, %v2683, %v2847
      %v2849 = vsel %vm2828, %v2697, %v2690
      %v2850 = vsel %vm2830, %v2704, %v2849
      %v2851 = vsel %vm2832, %v2711, %v2850
      %v2852 = vsel %vm2834, %v2718, %v2851
      %v2853 = vsel %vm2836, %v2725, %v2852
      %v2854 = vsel %vm2838, %v2732, %v2853
      %v2855 = vsel %vm2840, %v2739, %v2854
      %v2856 = vsel %vm2828, %v2753, %v2746
      %v2857 = vsel %vm2830, %v2760, %v2856
      %v2858 = vsel %vm2832, %v2767, %v2857
      %v2859 = vsel %vm2834, %v2774, %v2858
      %v2860 = vsel %vm2836, %v2781, %v2859
      %v2861 = vsel %vm2838, %v2788, %v2860
      %v2862 = vsel %vm2840, %v2795, %v2861
      %2867 = vst [vmem:[%s288] sm:$0xff] %v2841
      %2868 = vst [vmem:[%s288 + $0x8] sm:$0xff] %v2848
      %2869 = vst [vmem:[%s288 + $0x10] sm:$0xff] %v2855
      %2870 = vst [vmem:[%s288 + $0x18] sm:$0xff] %v2862
      %v2871 = vpack.c.bf16 %v2578, %v2578
      %v2872 = vpack.c.bf16 %v2585, %v2585
      %v2873 = vpack.c.bf16 %v2592, %v2592
      %v2874 = vpack.c.bf16 %v2599, %v2599
      %v2875 = vpack.c.bf16 %v2606, %v2606
      %v2876 = vpack.c.bf16 %v2613, %v2613
      %v2877 = vpack.c.bf16 %v2620, %v2620
      %v2878 = vpack.c.bf16 %v2627, %v2627
      %v2879 = vpack.c.bf16 %v2634, %v2634
      %v2880 = vpack.c.bf16 %v2641, %v2641
      %v2881 = vpack.c.bf16 %v2648, %v2648
      %v2882 = vpack.c.bf16 %v2655, %v2655
      %v2883 = vpack.c.bf16 %v2662, %v2662
      %v2884 = vpack.c.bf16 %v2669, %v2669
      %v2885 = vpack.c.bf16 %v2676, %v2676
      %v2886 = vpack.c.bf16 %v2683, %v2683
      %v2887 = vpack.c.bf16 %v2690, %v2690
      %v2888 = vpack.c.bf16 %v2697, %v2697
      %v2889 = vpack.c.bf16 %v2704, %v2704
      %v2890 = vpack.c.bf16 %v2711, %v2711
      %v2891 = vpack.c.bf16 %v2718, %v2718
      %v2892 = vpack.c.bf16 %v2725, %v2725
      %v2893 = vpack.c.bf16 %v2732, %v2732
      %v2894 = vpack.c.bf16 %v2739, %v2739
      %v2895 = vpack.c.bf16 %v2746, %v2746
      %v2896 = vpack.c.bf16 %v2753, %v2753
      %v2897 = vpack.c.bf16 %v2760, %v2760
      %v2898 = vpack.c.bf16 %v2767, %v2767
      %v2899 = vpack.c.bf16 %v2774, %v2774
      %v2900 = vpack.c.bf16 %v2781, %v2781
      %v2901 = vpack.c.bf16 %v2788, %v2788
      %v2902 = vpack.c.bf16 %v2795, %v2795
      %v2903 = vld [vmem:[%s4] sm:$0xf]
      %v2904 = vld [vmem:[%s4 + $0x4] sm:$0xf]
      %v2905 = vld [vmem:[%s4 + $0x8] sm:$0xf]
      %v2906 = vld [vmem:[%s4 + $0xc] sm:$0xf]
      %v2907 = vld [vmem:[%s4 + $0x10] sm:$0xf]
      %v2908 = vld [vmem:[%s4 + $0x14] sm:$0xf]
      %v2909 = vld [vmem:[%s4 + $0x18] sm:$0xf]
      %v2910 = vld [vmem:[%s4 + $0x1c] sm:$0xf]
      %v2911 = vld [vmem:[%s4 + $0x20] sm:$0xf]
      %v2912 = vld [vmem:[%s4 + $0x24] sm:$0xf]
      %v2913 = vld [vmem:[%s4 + $0x28] sm:$0xf]
      %v2914 = vld [vmem:[%s4 + $0x2c] sm:$0xf]
      %v2915 = vld [vmem:[%s4 + $0x30] sm:$0xf]
      %v2916 = vld [vmem:[%s4 + $0x34] sm:$0xf]
      %v2917 = vld [vmem:[%s4 + $0x38] sm:$0xf]
      %v2918 = vld [vmem:[%s4 + $0x3c] sm:$0xf]
      %v2919 = vld [vmem:[%s5] sm:$0x1]
      %v2921 = vlaneseq
      %v2922 = vshrl.u32 %v2921, 7
      %v2923 = vsub.s32 0, %v2922
      %v2924 = vrot.slane %v2919, %v2923
      %v2958 = vunpack.c.l.b16 %v2871
      %v2959 = vunpack.c.l.b16 %v2872
      %v2960 = vunpack.c.l.b16 %v2873
      %v2961 = vunpack.c.l.b16 %v2874
      %v2962 = vunpack.c.l.b16 %v2875
      %v2963 = vunpack.c.l.b16 %v2876
      %v2964 = vunpack.c.l.b16 %v2877
      %v2965 = vunpack.c.l.b16 %v2878
      %v2966 = vunpack.c.l.b16 %v2879
      %v2967 = vunpack.c.l.b16 %v2880
      %v2968 = vunpack.c.l.b16 %v2881
      %v2969 = vunpack.c.l.b16 %v2882
      %v2970 = vunpack.c.l.b16 %v2883
      %v2971 = vunpack.c.l.b16 %v2884
      %v2972 = vunpack.c.l.b16 %v2885
      %v2973 = vunpack.c.l.b16 %v2886
      %v2974 = vunpack.c.l.b16 %v2887
      %v2975 = vunpack.c.l.b16 %v2888
      %v2976 = vunpack.c.l.b16 %v2889
      %v2977 = vunpack.c.l.b16 %v2890
      %v2978 = vunpack.c.l.b16 %v2891
      %v2979 = vunpack.c.l.b16 %v2892
      %v2980 = vunpack.c.l.b16 %v2893
      %v2981 = vunpack.c.l.b16 %v2894
      %v2982 = vunpack.c.l.b16 %v2895
      %v2983 = vunpack.c.l.b16 %v2896
      %v2984 = vunpack.c.l.b16 %v2897
      %v2985 = vunpack.c.l.b16 %v2898
      %v2986 = vunpack.c.l.b16 %v2899
      %v2987 = vunpack.c.l.b16 %v2900
      %v2988 = vunpack.c.l.b16 %v2901
      %v2989 = vunpack.c.l.b16 %v2902
      %v2990 = vsel %vm2828, %v2959, %v2958
      %v2991 = vsel %vm2830, %v2960, %v2990
      %v2992 = vsel %vm2832, %v2961, %v2991
      %v2993 = vsel %vm2834, %v2962, %v2992
      %v2994 = vsel %vm2836, %v2963, %v2993
      %v2995 = vsel %vm2838, %v2964, %v2994
      %v2996 = vsel %vm2840, %v2965, %v2995
      %v2997 = vsel %vm2828, %v2967, %v2966
      %v2998 = vsel %vm2830, %v2968, %v2997
      %v2999 = vsel %vm2832, %v2969, %v2998
      %v3000 = vsel %vm2834, %v2970, %v2999
      %v3001 = vsel %vm2836, %v2971, %v3000
      %v3002 = vsel %vm2838, %v2972, %v3001
      %v3003 = vsel %vm2840, %v2973, %v3002
      %v3004 = vsel %vm2828, %v2975, %v2974
      %v3005 = vsel %vm2830, %v2976, %v3004
      %v3006 = vsel %vm2832, %v2977, %v3005
      %v3007 = vsel %vm2834, %v2978, %v3006
      %v3008 = vsel %vm2836, %v2979, %v3007
      %v3009 = vsel %vm2838, %v2980, %v3008
      %v3010 = vsel %vm2840, %v2981, %v3009
      %v3011 = vsel %vm2828, %v2983, %v2982
      %v3012 = vsel %vm2830, %v2984, %v3011
      %v3013 = vsel %vm2832, %v2985, %v3012
      %v3014 = vsel %vm2834, %v2986, %v3013
      %v3015 = vsel %vm2836, %v2987, %v3014
      %v3016 = vsel %vm2838, %v2988, %v3015
      %v3017 = vsel %vm2840, %v2989, %v3016
      %v3018 = vpack.c.b16 %v3003, %v2996
      %v3019 = vpack.c.b16 %v3017, %v3010
      %v3038 = vunpack.c.l.b16 %v2903
      %v3039 = vunpack.c.l.b16 %v2904
      %v3040 = vunpack.c.l.b16 %v2905
      %v3041 = vunpack.c.l.b16 %v2906
      %v3042 = vunpack.c.l.b16 %v2907
      %v3043 = vunpack.c.l.b16 %v2908
      %v3044 = vunpack.c.l.b16 %v2909
      %v3045 = vunpack.c.l.b16 %v2910
      %v3046 = vunpack.c.l.b16 %v2911
      %v3047 = vunpack.c.l.b16 %v2912
      %v3048 = vunpack.c.l.b16 %v2913
      %v3049 = vunpack.c.l.b16 %v2914
      %v3050 = vunpack.c.l.b16 %v2915
      %v3051 = vunpack.c.l.b16 %v2916
      %v3052 = vunpack.c.l.b16 %v2917
      %v3053 = vunpack.c.l.b16 %v2918
      %v3054 = vpack.c.b16 %v3039, %v3038
      %v3055 = vpack.c.b16 %v3041, %v3040
      %v3056 = vpack.c.b16 %v3043, %v3042
      %v3057 = vpack.c.b16 %v3045, %v3044
      %v3058 = vpack.c.b16 %v3047, %v3046
      %v3059 = vpack.c.b16 %v3049, %v3048
      %v3060 = vpack.c.b16 %v3051, %v3050
      %v3061 = vpack.c.b16 %v3053, %v3052
      %3070 = vmatprep.subr.bf16.mxu0 0
      %3071 = vmatpush1.bf16.msra.mxu0 %v3054
      %3072 = vmatprep.subr.bf16.mxu0 0
      %3073 = vmatpush1.bf16.msra.mxu0 %v3055
      %3074 = vmatprep.subr.bf16.mxu0 0
      %3075 = vmatpush1.bf16.msra.mxu0 %v3056
      %3076 = vmatprep.subr.bf16.mxu0 0
      %3077 = vmatpush1.bf16.msra.mxu0 %v3057
      %3078 = vmatprep.subr.bf16.mxu0 0
      %3079 = vmatpush1.bf16.msra.mxu0 %v3058
      %3080 = vmatprep.subr.bf16.mxu0 0
      %3081 = vmatpush1.bf16.msra.mxu0 %v3059
      %3082 = vmatprep.subr.bf16.mxu0 0
      %3083 = vmatpush1.bf16.msra.mxu0 %v3060
      %3084 = vmatprep.subr.bf16.mxu0 0
      %3085 = vmatpush1.bf16.msra.mxu0 %v3061
      %3086 = vmatprep.subr.bf16.mxu0 0
      %3087 = vmatpush1.bf16.msra.mxu0 0
      %3088 = vmatprep.subr.bf16.mxu0 0
      %3089 = vmatpush1.bf16.msra.mxu0 0
      %3090 = vmatprep.subr.bf16.mxu0 0
      %3091 = vmatpush1.bf16.msra.mxu0 0
      %3092 = vmatprep.subr.bf16.mxu0 0
      %3093 = vmatpush1.bf16.msra.mxu0 0
      %3094 = vmatprep.subr.bf16.mxu0 0
      %3095 = vmatpush1.bf16.msra.mxu0 0
      %3096 = vmatprep.subr.bf16.mxu0 0
      %3097 = vmatpush1.bf16.msra.mxu0 0
      %3098 = vmatprep.subr.bf16.mxu0 0
      %3099 = vmatpush1.bf16.msra.mxu0 0
      %3100 = vmatprep.subr.bf16.mxu0 0
      %3101 = vmatpush1.bf16.msra.mxu0 0
      %3102 = vmatprep.mubr.bf16.mxu0 0
      %3103 = vmatmul.mubr.bf16.gmra.mrb[0].mxu0 %v3018
      %v3104 = vpop.f32.mrb[0].mxu0
      %v3105 = vadd.f32 %v2924, %v3104
      %v3106 = vpop.f32.mrb[0].mxu0
      %v3107 = vpop.f32.mrb[0].mxu0
      %v3108 = vadd.f32 %v2924, %v3107
      %v3109 = vpop.f32.mrb[0].mxu0
      %3110 = vmatprep.mubr.bf16.mxu0 0
      %3111 = vmatmul.mubr.bf16.gmra.mrb[0].mxu0 %v3019
      %v3112 = vpop.f32.mrb[0].mxu0
      %v3113 = vadd.f32 %v2924, %v3112
      %v3114 = vpop.f32.mrb[0].mxu0
      %v3115 = vpop.f32.mrb[0].mxu0
      %v3116 = vadd.f32 %v2924, %v3115
      %v3117 = vpop.f32.mrb[0].mxu0
      %3118 = vdwg.mxu0
      %3119 = vmax.xlane.f32.xlu0 %v3105
      %v3120 = vpop.xlane.xlu0 %3119
      %3121 = vmax.xlane.f32.xlu0 %v3108
      %v3122 = vpop.xlane.xlu0 %3121
      %3123 = vmax.xlane.f32.xlu0 %v3113
      %v3124 = vpop.xlane.xlu0 %3123
      %3125 = vmax.xlane.f32.xlu0 %v3116
      %v3126 = vpop.xlane.xlu0 %3125
      %v3127 = vsub.f32 %v3105, %v3120
      %v3128 = vsub.f32 %v3108, %v3122
      %v3129 = vsub.f32 %v3113, %v3124
      %v3130 = vsub.f32 %v3116, %v3126
      %v3131 = vmul.f32 %v3127, 1.442695
      %v3132 = vpow.pop %v3131
      %v3133 = vmul.f32 %v3128, 1.442695
      %v3134 = vpow.pop %v3133
      %v3135 = vmul.f32 %v3129, 1.442695
      %v3136 = vpow.pop %v3135
      %v3137 = vmul.f32 %v3130, 1.442695
      %v3138 = vpow.pop %v3137
      %3139 = vadd.xlane.f32.xlu0 %v3132
      %v3140 = vpop.xlane.xlu0 %3139
      %3141 = vadd.xlane.f32.xlu0 %v3134
      %v3142 = vpop.xlane.xlu0 %3141
      %3143 = vadd.xlane.f32.xlu0 %v3136
      %v3144 = vpop.xlane.xlu0 %3143
      %3145 = vadd.xlane.f32.xlu0 %v3138
      %v3146 = vpop.xlane.xlu0 %3145
      %v3147 = vrcp.pop %v3140
      %v3148 = vrcp.pop %v3142
      %v3149 = vrcp.pop %v3144
      %v3150 = vrcp.pop %v3146
      %v3151 = vmul.f32 %v3132, %v3147
      %v3152 = vmul.f32 %v3134, %v3148
      %v3153 = vmul.f32 %v3136, %v3149
      %v3154 = vmul.f32 %v3138, %v3150
      %3155 = vst [vmem:[%s294] sm:$0xff] %v3151
      %3156 = vst [vmem:[%s294 + $0x8] sm:$0xff] %v3152
      %3157 = vst [vmem:[%s294 + $0x10] sm:$0xff] %v3153
      %3158 = vst [vmem:[%s294 + $0x18] sm:$0xff] %v3154
      %s3159 = smul.u32 4, %s19
      %p3160 = scmp.lt.s32.totalorder %s3159, 7
      %s3161 = scalar_select %p3160, %s3159, 7
      %s3162 = smul.addr %s3161, 8
      %s3163 = scalar_lea.vmem %s6, %s3162
      %s3164 = smul.u32 4, %s19
      %p3165 = scmp.lt.s32.totalorder %s3164, 7
      %s3166 = scalar_select %p3165, %s3164, 7
      %s3167 = smul.addr %s3166, 8
      %s3168 = scalar_lea.vmem %s7, %s3167
      // Predicated region
      $region45: #{text_cnn_forward.1} parent=43 // pred_check
        %p3169 = pneg %p168
      $region46: #{text_cnn_forward.1} parent=43 // pred_check_branch
        %3171 = sbr.rel (%p3169) target = $region48
      $region47: #{text_cnn_forward.1} parent=43 // pred_region
        %s3172 = smul.u32 4, %s19
      $region48: #{text_cnn_forward.1} parent=43 // pred_fallthru
        _
      // Predicated region
      $region49: #{text_cnn_forward.1} parent=43 // pred_check
        %p3173 = pneg %p194
      $region50: #{text_cnn_forward.1} parent=43 // pred_check_branch
        %3175 = sbr.rel (%p3173) target = $region52
      $region51: #{text_cnn_forward.1} parent=43 // pred_region
        %s3176 = smul.u32 4, %s19
      $region52: #{text_cnn_forward.1} parent=43 // pred_fallthru
        _
    $region44: #{text_cnn_forward.1} parent=5 // pred_fallthru
      _
    %p3177 = scmp.le.s32.totalorder 2, %s14
    // Predicated region
    $region53: #{text_cnn_forward.1} parent=5 // pred_check
      %p3178 = pneg %p3177
    $region54: #{text_cnn_forward.1} parent=5 // pred_check_branch
      %3180 = sbr.rel (%p3178) target = $region56
    $region55: #{text_cnn_forward.1} parent=5 // pred_region
      %s3181 = ssub.s32 %s14, 2
      // Predicated region
      $region57: #{text_cnn_forward.1} parent=55 // pred_check
        %p3182 = pneg %p174
      $region58: #{text_cnn_forward.1} parent=55 // pred_check_branch
        %3184 = sbr.rel (%p3182) target = $region60
      $region59: #{text_cnn_forward.1} parent=55 // pred_region
        %s3185 = smul.u32 4, %s20
        %p3186 = scmp.lt.s32.totalorder %s3185, 7
        %s3187 = scalar_select %p3186, %s3185, 7
        %s3188 = smul.addr %s3187, 8
        %s3189 = scalar_lea.vmem %s6, %s3188
      $region60: #{text_cnn_forward.1} parent=55 // pred_fallthru
        _
      // Predicated region
      $region61: #{text_cnn_forward.1} parent=55 // pred_check
        %p3190 = pneg %p200
      $region62: #{text_cnn_forward.1} parent=55 // pred_check_branch
        %3192 = sbr.rel (%p3190) target = $region64
      $region63: #{text_cnn_forward.1} parent=55 // pred_region
        %s3193 = smul.u32 4, %s20
        %p3194 = scmp.lt.s32.totalorder %s3193, 7
        %s3195 = scalar_select %p3194, %s3193, 7
        %s3196 = smul.addr %s3195, 8
        %s3197 = scalar_lea.vmem %s7, %s3196
      $region64: #{text_cnn_forward.1} parent=55 // pred_fallthru
        _
    $region56: #{text_cnn_forward.1} parent=5 // pred_fallthru
      _
  $region6: #{text_cnn_forward.1} parent=0 // loop_footer
    %s18 = sadd.s32 1, %s14
  $region7: #{text_cnn_forward.1} parent=0 // loop_footer_branch
    %13 = sbr.rel target = $region3
  $region8: #{text_cnn_forward.1} parent=0 // loop_exit
    _

</llo_original>
